<compile_context>
chip_gen: v6e
topology: v6e:2x2x1
jax: 0.10.0
libtpu: 0.0.40
codegen_flags: <defaults>
</compile_context>

<pallas_src>
import functools

import jax
import jax.numpy as jnp
from jax.experimental import pallas as pl
from jax.experimental.pallas import tpu as pltpu

LANE = 128          # lane width
TILE_B_ALIGN = 16   # batch-tile granule (bf16 sublane pack = 16; also covers f32's 8)


def _ceil_to(n, m):
    return ((n + m - 1) // m) * m


def dnn_kernel(x_ref, w1_ref, b1_ref, w2_ref, b2_ref, wo_ref, bo_ref, out_ref,
               *, num_classes):
    # ---- hidden layer 1: Linear (bf16 MXU operands, f32 accumulate) + bias + ReLU ----
    x = x_ref[...].astype(jnp.bfloat16)          # cast in-kernel; x DMA stays unpadded
    h = jnp.dot(x, w1_ref[...], preferred_element_type=jnp.float32)
    h = jnp.maximum(h + b1_ref[...], 0.0)

    # ---- hidden layer 2 ----
    h = jnp.dot(h.astype(jnp.bfloat16), w2_ref[...],
                preferred_element_type=jnp.float32)
    h = jnp.maximum(h + b2_ref[...], 0.0)

    # ---- Dropout: identity in eval mode (self.training == False) ----
    # TODO(synk): training-mode dropout (RNG mask) not implemented.

    # ---- output layer: Linear ----
    logits = jnp.dot(h.astype(jnp.bfloat16), wo_ref[...],
                     preferred_element_type=jnp.float32)
    logits = logits + bo_ref[...]

    # ---- Softmax over dim=1 (f32, numerically stable); padded lanes masked ----
    col = jax.lax.broadcasted_iota(jnp.int32, logits.shape, 1)
    valid = col < num_classes
    m = jnp.max(jnp.where(valid, logits, -jnp.inf), axis=1, keepdims=True)
    e = jnp.where(valid, jnp.exp(logits - m), 0.0)   # padded classes contribute 0
    denom = jnp.sum(e, axis=1, keepdims=True)
    r = pl.reciprocal(denom, approx=True)            # EUP slot
    r = r * (2.0 - denom * r)                        # one Newton step -> ~exact
    out_ref[...] = (e * r).astype(out_ref.dtype)     # lane-dense bf16 store


def prepare_params(params):
    """One-time pad + bf16 cast of weights/biases (hoisted out of the hot path).

    params = (w1, b1, w2, b2, wo, bo), weights in (in, out) layout (PyTorch
    weights pre-transposed), biases (1, out).  Output feature dims are padded
    to the 128-lane granule; the input feature dim of w1 is left unpadded so
    the kernel can consume x directly.
    """
    w1, b1, w2, b2, wo, bo = params
    D, H1 = w1.shape
    H2, C = w2.shape[1], wo.shape[1]
    H1P, H2P, CP = (_ceil_to(d, LANE) for d in (H1, H2, C))
    w1p = jnp.zeros((D, H1P), jnp.float32).at[:, :H1].set(w1).astype(jnp.bfloat16)
    w2p = jnp.zeros((H1P, H2P), jnp.float32).at[:H1, :H2].set(w2).astype(jnp.bfloat16)
    wop = jnp.zeros((H2P, CP), jnp.float32).at[:H2, :C].set(wo).astype(jnp.bfloat16)
    b1p = jnp.zeros((1, H1P), jnp.float32).at[:, :H1].set(b1)
    b2p = jnp.zeros((1, H2P), jnp.float32).at[:, :H2].set(b2)
    bop = jnp.zeros((1, CP), jnp.float32).at[:, :C].set(bo)
    return (w1p, b1p, w2p, b2p, wop, bop)


def _pick_batch_tile(batch):
    """Per-generation batch tile: collapse the grid on single-TC v5e/v6e,
    keep a few parallel tiles for the two TensorCores on v7x."""
    bp = _ceil_to(batch, TILE_B_ALIGN)
    try:
        kind = jax.devices()[0].device_kind.lower()
    except Exception:  # pragma: no cover - defensive only
        kind = ""
    if "v7" in kind or "7x" in kind:
        n_tiles = 4 if bp >= 4 * TILE_B_ALIGN else 2
        return _ceil_to(pl.cdiv(bp, n_tiles), TILE_B_ALIGN)
    # Single TensorCore: one grid step avoids ~0.35 us/step pipeline overhead.
    return min(bp, 2048)


def dnn_forward(x, padded_params, *, num_classes):
    """Fused DNN forward on pre-padded params (see prepare_params)."""
    w1p, b1p, w2p, b2p, wop, bop = padded_params
    B, D = x.shape
    H1P, H2P, CP = w1p.shape[1], w2p.shape[1], wop.shape[1]

    TB = _pick_batch_tile(B)
    BP = _ceil_to(B, TB)
    if BP != B:  # pad batch only if needed; padded rows are sliced away below
        x = jnp.zeros((BP, D), x.dtype).at[:B].set(x)

    grid = (BP // TB,)
    resident = lambda shape: pl.BlockSpec(shape, lambda i: (0, 0))

    param_bytes = sum(p.size * p.dtype.itemsize for p in padded_params)
    flops = 2 * BP * (D * H1P + H1P * H2P + H2P * CP)
    bytes_accessed = BP * D * x.dtype.itemsize + param_bytes + BP * CP * 2
    cost = pl.CostEstimate(flops=flops, transcendentals=BP * CP,
                           bytes_accessed=bytes_accessed)

    # VMEM budget from the actual tile footprint (double-buffered activation
    # tiles + resident weights + f32 intermediates), with generous headroom.
    tile_bytes = (2 * TB * D * x.dtype.itemsize      # x tile, double-buffered
                  + 2 * TB * CP * 2                  # bf16 out tile, double-buffered
                  + 2 * param_bytes                  # resident weights/biases
                  + TB * (H1P + H2P + CP) * 4)       # f32 intermediates
    vmem_limit = int(min(48 * 1024 * 1024, max(8 * 1024 * 1024, 4 * tile_bytes)))

    out_padded = pl.pallas_call(
        functools.partial(dnn_kernel, num_classes=num_classes),
        out_shape=jax.ShapeDtypeStruct((BP, CP), jnp.bfloat16),
        grid=grid,
        in_specs=[
            pl.BlockSpec((TB, D), lambda i: (i, 0)),   # x: pipelined batch tile, unpadded D
            resident((D, H1P)), resident((1, H1P)),    # weights/biases: VMEM-resident
            resident((H1P, H2P)), resident((1, H2P)),
            resident((H2P, CP)), resident((1, CP)),
        ],
        out_specs=pl.BlockSpec((TB, CP), lambda i: (i, 0)),  # lane-dense bf16 slab
        compiler_params=pltpu.CompilerParams(
            dimension_semantics=("parallel",),          # megacore-shardable on v7x
            vmem_limit_bytes=vmem_limit,
        ),
        cost_estimate=cost,
    )(x, w1p, b1p, w2p, b2p, wop, bop)

    # Slice away padded batch rows / class lanes; restore f32 for API parity.
    return out_padded[:B, :num_classes].astype(jnp.float32)


def init_params(key, input_size, layer_sizes, output_size):
    """Deterministic synthetic params mirroring nn.Linear shapes.
    PyTorch stores weight as (out, in); we pre-transpose to (in, out)."""
    dims = [input_size] + list(layer_sizes) + [output_size]
    params = []
    for i in range(len(dims) - 1):
        key, kw, kb = jax.random.split(key, 3)
        fan_in, fan_out = dims[i], dims[i + 1]
        bound = 1.0 / jnp.sqrt(jnp.float32(fan_in))
        w = jax.random.uniform(kw, (fan_in, fan_out), jnp.float32, -bound, bound)
        b = jax.random.uniform(kb, (1, fan_out), jnp.float32, -bound, bound)
        params += [w, b]
    return tuple(params)


def reference_forward(x, params):
    """Pure-JAX reference with the same bf16 MXU-operand rounding as the kernel."""
    w1, b1, w2, b2, wo, bo = params
    bf = lambda a: a.astype(jnp.bfloat16).astype(jnp.float32)
    h = jnp.maximum(bf(x) @ bf(w1) + b1, 0.0)
    h = jnp.maximum(bf(h) @ bf(w2) + b2, 0.0)
    logits = bf(h) @ bf(wo) + bo
    return jax.nn.softmax(logits, axis=1)


if __name__ == "__main__":
    # Shapes implied by the module: flat features -> 2 hidden layers -> classes.
    B, INPUT_SIZE, LAYER_SIZES, OUTPUT_SIZE = 256, 32, [64, 32], 8  # ClassNum = 8 (!= 1)

    key = jax.random.PRNGKey(0)
    key, kx = jax.random.split(key)
    x = jax.random.normal(kx, (B, INPUT_SIZE), jnp.float32)
    params = init_params(key, INPUT_SIZE, LAYER_SIZES, OUTPUT_SIZE)

    padded_params = prepare_params(params)               # one-time, outside hot path
    fwd = jax.jit(dnn_forward, static_argnames=("num_classes",))
    out = fwd(x, padded_params, num_classes=OUTPUT_SIZE)
    out = jax.block_until_ready(out)

    ref = reference_forward(x, params)
    assert out.shape == (B, OUTPUT_SIZE)
    # Output slab is bf16 (~3 decimal digits); compare with matching tolerance.
    assert jnp.allclose(out, ref, atol=2e-2), "mismatch vs pure-JAX reference"
    assert jnp.allclose(jnp.sum(out, axis=1), 1.0, atol=2e-2), "softmax rows must sum to ~1"

    print("KERNEL_OK")
</pallas_src>

<mosaic_0001>
module attributes {stable_mosaic.version = 11 : i64} {
  func.func @dnn_kernel(%arg0: i32, %arg1: memref<256x32xf32, #tpu.memory_space<vmem>>, %arg2: memref<32x128xbf16, #tpu.memory_space<vmem>>, %arg3: memref<1x128xf32, #tpu.memory_space<vmem>>, %arg4: memref<128x128xbf16, #tpu.memory_space<vmem>>, %arg5: memref<1x128xf32, #tpu.memory_space<vmem>>, %arg6: memref<128x128xbf16, #tpu.memory_space<vmem>>, %arg7: memref<1x128xf32, #tpu.memory_space<vmem>>, %arg8: memref<256x128xbf16, #tpu.memory_space<vmem>>) attributes {dimension_semantics = [#tpu.dimension_semantics<parallel>], iteration_bounds = array<i64: 1>, scalar_prefetch = 0 : i64, scratch_operands = 0 : i64, tpu.core_type = #tpu.core_type<tc>, window_params = [{transform_indices = @transform_0, window_bounds = array<i64: 256, 32>}, {pipeline_mode = #tpu.pipeline_mode<synchronous>, transform_indices = @transform_1, window_bounds = array<i64: 32, 128>}, {pipeline_mode = #tpu.pipeline_mode<synchronous>, transform_indices = @transform_2, window_bounds = array<i64: 1, 128>}, {pipeline_mode = #tpu.pipeline_mode<synchronous>, transform_indices = @transform_3, window_bounds = array<i64: 128, 128>}, {pipeline_mode = #tpu.pipeline_mode<synchronous>, transform_indices = @transform_4, window_bounds = array<i64: 1, 128>}, {pipeline_mode = #tpu.pipeline_mode<synchronous>, transform_indices = @transform_5, window_bounds = array<i64: 128, 128>}, {pipeline_mode = #tpu.pipeline_mode<synchronous>, transform_indices = @transform_6, window_bounds = array<i64: 1, 128>}, {transform_indices = @transform_7, window_bounds = array<i64: 256, 128>}]} {
    %c0 = arith.constant 0 : index
    %c0_0 = arith.constant 0 : index
    %0 = vector.load %arg1[%c0, %c0_0] : memref<256x32xf32, #tpu.memory_space<vmem>>, vector<256x32xf32>
    %1 = arith.truncf %0 : vector<256x32xf32> to vector<256x32xbf16>
    %c0_1 = arith.constant 0 : index
    %c0_2 = arith.constant 0 : index
    %2 = vector.load %arg2[%c0_1, %c0_2] : memref<32x128xbf16, #tpu.memory_space<vmem>>, vector<32x128xbf16>
    %cst = arith.constant dense<0.000000e+00> : vector<256x128xf32>
    %3 = tpu.matmul %1, %2, %cst {dimension_numbers = #tpu.dot_dimension_numbers<[1], [0], [0], [1], [0, 0, 1, 1], [], []>} : vector<256x32xbf16>, vector<32x128xbf16>, vector<256x128xf32> -> vector<256x128xf32>
    %c0_3 = arith.constant 0 : index
    %c0_4 = arith.constant 0 : index
    %4 = vector.load %arg3[%c0_3, %c0_4] : memref<1x128xf32, #tpu.memory_space<vmem>>, vector<1x128xf32>
    %5 = vector.broadcast %4 : vector<1x128xf32> to vector<256x128xf32>
    %6 = arith.addf %3, %5 : vector<256x128xf32>
    %cst_5 = arith.constant 0.000000e+00 : f32
    %7 = vector.broadcast %cst_5 : f32 to vector<256x128xf32>
    %8 = arith.maximumf %6, %7 : vector<256x128xf32>
    %9 = arith.truncf %8 : vector<256x128xf32> to vector<256x128xbf16>
    %c0_6 = arith.constant 0 : index
    %c0_7 = arith.constant 0 : index
    %10 = vector.load %arg4[%c0_6, %c0_7] : memref<128x128xbf16, #tpu.memory_space<vmem>>, vector<128x128xbf16>
    %cst_8 = arith.constant dense<0.000000e+00> : vector<256x128xf32>
    %11 = tpu.matmul %9, %10, %cst_8 {dimension_numbers = #tpu.dot_dimension_numbers<[1], [0], [0], [1], [0, 0, 1, 1], [], []>} : vector<256x128xbf16>, vector<128x128xbf16>, vector<256x128xf32> -> vector<256x128xf32>
    %c0_9 = arith.constant 0 : index
    %c0_10 = arith.constant 0 : index
    %12 = vector.load %arg5[%c0_9, %c0_10] : memref<1x128xf32, #tpu.memory_space<vmem>>, vector<1x128xf32>
    %13 = vector.broadcast %12 : vector<1x128xf32> to vector<256x128xf32>
    %14 = arith.addf %11, %13 : vector<256x128xf32>
    %cst_11 = arith.constant 0.000000e+00 : f32
    %15 = vector.broadcast %cst_11 : f32 to vector<256x128xf32>
    %16 = arith.maximumf %14, %15 : vector<256x128xf32>
    %17 = arith.truncf %16 : vector<256x128xf32> to vector<256x128xbf16>
    %c0_12 = arith.constant 0 : index
    %c0_13 = arith.constant 0 : index
    %18 = vector.load %arg6[%c0_12, %c0_13] : memref<128x128xbf16, #tpu.memory_space<vmem>>, vector<128x128xbf16>
    %cst_14 = arith.constant dense<0.000000e+00> : vector<256x128xf32>
    %19 = tpu.matmul %17, %18, %cst_14 {dimension_numbers = #tpu.dot_dimension_numbers<[1], [0], [0], [1], [0, 0, 1, 1], [], []>} : vector<256x128xbf16>, vector<128x128xbf16>, vector<256x128xf32> -> vector<256x128xf32>
    %c0_15 = arith.constant 0 : index
    %c0_16 = arith.constant 0 : index
    %20 = vector.load %arg7[%c0_15, %c0_16] : memref<1x128xf32, #tpu.memory_space<vmem>>, vector<1x128xf32>
    %21 = vector.broadcast %20 : vector<1x128xf32> to vector<256x128xf32>
    %22 = arith.addf %19, %21 : vector<256x128xf32>
    %23 = tpu.iota {dimensions = array<i32: 1>} : vector<256x128xi32>
    %c8_i32 = arith.constant 8 : i32
    %24 = vector.broadcast %c8_i32 : i32 to vector<256x128xi32>
    %25 = arith.cmpi slt, %23, %24 : vector<256x128xi32>
    %cst_17 = arith.constant 0xFF800000 : f32
    %26 = vector.broadcast %cst_17 : f32 to vector<256x128xf32>
    %27 = arith.select %25, %22, %26 : vector<256x128xi1>, vector<256x128xf32>
    %cst_18 = arith.constant dense<0xFF800000> : vector<256xf32>
    %28 = vector.multi_reduction <maximumf>, %27, %cst_18 [1] : vector<256x128xf32> to vector<256xf32>
    %29 = vector.shape_cast %28 : vector<256xf32> to vector<256x1xf32>
    %30 = vector.broadcast %29 : vector<256x1xf32> to vector<256x128xf32>
    %31 = arith.subf %22, %30 : vector<256x128xf32>
    %32 = math.exp %31 : vector<256x128xf32>
    %cst_19 = arith.constant 0.000000e+00 : f32
    %33 = vector.broadcast %cst_19 : f32 to vector<256x128xf32>
    %34 = arith.select %25, %32, %33 : vector<256x128xi1>, vector<256x128xf32>
    %cst_20 = arith.constant dense<0.000000e+00> : vector<256xf32>
    %35 = vector.multi_reduction <add>, %34, %cst_20 [1] : vector<256x128xf32> to vector<256xf32>
    %36 = vector.shape_cast %35 : vector<256xf32> to vector<256x1xf32>
    %37 = tpu.reciprocal %36 {approx = true} : vector<256x1xf32> -> vector<256x1xf32>
    %38 = arith.mulf %36, %37 : vector<256x1xf32>
    %cst_21 = arith.constant 2.000000e+00 : f32
    %39 = vector.broadcast %cst_21 : f32 to vector<256x1xf32>
    %40 = arith.subf %39, %38 : vector<256x1xf32>
    %41 = arith.mulf %37, %40 : vector<256x1xf32>
    %42 = vector.broadcast %41 : vector<256x1xf32> to vector<256x128xf32>
    %43 = arith.mulf %34, %42 : vector<256x128xf32>
    %44 = arith.truncf %43 : vector<256x128xf32> to vector<256x128xbf16>
    %c0_22 = arith.constant 0 : index
    %c0_23 = arith.constant 0 : index
    %45 = vector.load %arg8[%c0_22, %c0_23] : memref<256x128xbf16, #tpu.memory_space<vmem>>, vector<256x128xbf16>
    tpu.vector_store %arg8[%c0_22, %c0_23], %44 {strides = array<i32>} : memref<256x128xbf16, #tpu.memory_space<vmem>>, vector<256x128xbf16>,
    return
  }
  func.func @transform_0(%arg0: i32) -> (i32, i32) {
    %c0_i32 = arith.constant 0 : i32
    %c0_i32_0 = arith.constant 0 : i32
    return %arg0, %c0_i32 : i32, i32
  }
  func.func @transform_1(%arg0: i32) -> (i32, i32) {
    %c0_i32 = arith.constant 0 : i32
    %c0_i32_0 = arith.constant 0 : i32
    %c0_i32_1 = arith.constant 0 : i32
    return %c0_i32, %c0_i32_0 : i32, i32
  }
  func.func @transform_2(%arg0: i32) -> (i32, i32) {
    %c0_i32 = arith.constant 0 : i32
    %c0_i32_0 = arith.constant 0 : i32
    %c0_i32_1 = arith.constant 0 : i32
    return %c0_i32, %c0_i32_0 : i32, i32
  }
  func.func @transform_3(%arg0: i32) -> (i32, i32) {
    %c0_i32 = arith.constant 0 : i32
    %c0_i32_0 = arith.constant 0 : i32
    %c0_i32_1 = arith.constant 0 : i32
    return %c0_i32, %c0_i32_0 : i32, i32
  }
  func.func @transform_4(%arg0: i32) -> (i32, i32) {
    %c0_i32 = arith.constant 0 : i32
    %c0_i32_0 = arith.constant 0 : i32
    %c0_i32_1 = arith.constant 0 : i32
    return %c0_i32, %c0_i32_0 : i32, i32
  }
  func.func @transform_5(%arg0: i32) -> (i32, i32) {
    %c0_i32 = arith.constant 0 : i32
    %c0_i32_0 = arith.constant 0 : i32
    %c0_i32_1 = arith.constant 0 : i32
    return %c0_i32, %c0_i32_0 : i32, i32
  }
  func.func @transform_6(%arg0: i32) -> (i32, i32) {
    %c0_i32 = arith.constant 0 : i32
    %c0_i32_0 = arith.constant 0 : i32
    %c0_i32_1 = arith.constant 0 : i32
    return %c0_i32, %c0_i32_0 : i32, i32
  }
  func.func @transform_7(%arg0: i32) -> (i32, i32) {
    %c0_i32 = arith.constant 0 : i32
    %c0_i32_0 = arith.constant 0 : i32
    return %arg0, %c0_i32 : i32, i32
  }
}

</mosaic_0001>

<llo_original>
// kernel: dnn_forward.1
$region0: #{dnn_forward.1}
  #allocation0 [shape = 'u32[]', space=smem, size = 0x4, offset = 0x4, fixed_abs, tag = 'smem constant byte address 0x4 - core index']
  #allocation1 [shape = 'u32[144,128]{1,0:T(1,128)}', space=vmem, size = 0x12000, scoped, tag = 'internal scratch']
  %s0 = inlined_call_operand.vmem [shape: f32[256,32], index: 0, kind: input, shape index: {}]
  %s1 = inlined_call_operand.vmem [shape: bf16[32,128], index: 1, kind: input, shape index: {}]
  %s2 = inlined_call_operand.vmem [shape: f32[1,128], index: 2, kind: input, shape index: {}]
  %s3 = inlined_call_operand.vmem [shape: bf16[128,128], index: 3, kind: input, shape index: {}]
  %s4 = inlined_call_operand.vmem [shape: f32[1,128], index: 4, kind: input, shape index: {}]
  %s5 = inlined_call_operand.vmem [shape: bf16[128,128], index: 5, kind: input, shape index: {}]
  %s6 = inlined_call_operand.vmem [shape: f32[1,128], index: 6, kind: input, shape index: {}]
  %s7 = inlined_call_operand.vmem [shape: bf16[256,128], index: 7, kind: output, shape index: {}]
  %s8 = sld [smem:[#allocation0]]
  $region38: #{dnn_forward.1} parent=0
    _
  %s10 = ssub.s32 1, %s8
  %s11 = scalar_select 0, %s10, %s8
  // Predicated region
  $region2: #{dnn_forward.1} parent=0 // pred_check
    _
  $region3: #{dnn_forward.1} parent=0 // pred_check_branch
    %13 = sbr.rel (0) target = $region5
  $region4: #{dnn_forward.1} parent=0 // pred_region
    _
  $region5: #{dnn_forward.1} parent=0 // pred_fallthru
    _
  // Predicated region
  $region6: #{dnn_forward.1} parent=0 // pred_check
    _
  $region7: #{dnn_forward.1} parent=0 // pred_check_branch
    %15 = sbr.rel (0) target = $region9
  $region8: #{dnn_forward.1} parent=0 // pred_region
    _
  $region9: #{dnn_forward.1} parent=0 // pred_fallthru
    _
  // Predicated region
  $region10: #{dnn_forward.1} parent=0 // pred_check
    _
  $region11: #{dnn_forward.1} parent=0 // pred_check_branch
    %17 = sbr.rel (0) target = $region13
  $region12: #{dnn_forward.1} parent=0 // pred_region
    _
  $region13: #{dnn_forward.1} parent=0 // pred_fallthru
    _
  // Predicated region
  $region14: #{dnn_forward.1} parent=0 // pred_check
    _
  $region15: #{dnn_forward.1} parent=0 // pred_check_branch
    %19 = sbr.rel (0) target = $region17
  $region16: #{dnn_forward.1} parent=0 // pred_region
    _
  $region17: #{dnn_forward.1} parent=0 // pred_fallthru
    _
  // Predicated region
  $region18: #{dnn_forward.1} parent=0 // pred_check
    _
  $region19: #{dnn_forward.1} parent=0 // pred_check_branch
    %21 = sbr.rel (0) target = $region21
  $region20: #{dnn_forward.1} parent=0 // pred_region
    _
  $region21: #{dnn_forward.1} parent=0 // pred_fallthru
    _
  // Predicated region
  $region22: #{dnn_forward.1} parent=0 // pred_check
    _
  $region23: #{dnn_forward.1} parent=0 // pred_check_branch
    %23 = sbr.rel (0) target = $region25
  $region24: #{dnn_forward.1} parent=0 // pred_region
    _
  $region25: #{dnn_forward.1} parent=0 // pred_fallthru
    _
  // Predicated region
  $region26: #{dnn_forward.1} parent=0 // pred_check
    _
  $region27: #{dnn_forward.1} parent=0 // pred_check_branch
    %25 = sbr.rel (0) target = $region29
  $region28: #{dnn_forward.1} parent=0 // pred_region
    _
  $region29: #{dnn_forward.1} parent=0 // pred_fallthru
    _
  %v27 = vld [vmem:[%s0] sm:$0xff]
  %v28 = vld [vmem:[%s0 + $0x8] sm:$0xff]
  %v29 = vld [vmem:[%s0 + $0x10] sm:$0xff]
  %v30 = vld [vmem:[%s0 + $0x18] sm:$0xff]
  %v31 = vld [vmem:[%s0 + $0x20] sm:$0xff]
  %v32 = vld [vmem:[%s0 + $0x28] sm:$0xff]
  %v33 = vld [vmem:[%s0 + $0x30] sm:$0xff]
  %v34 = vld [vmem:[%s0 + $0x38] sm:$0xff]
  %v35 = vld [vmem:[%s0 + $0x40] sm:$0xff]
  %v36 = vld [vmem:[%s0 + $0x48] sm:$0xff]
  %v37 = vld [vmem:[%s0 + $0x50] sm:$0xff]
  %v38 = vld [vmem:[%s0 + $0x58] sm:$0xff]
  %v39 = vld [vmem:[%s0 + $0x60] sm:$0xff]
  %v40 = vld [vmem:[%s0 + $0x68] sm:$0xff]
  %v41 = vld [vmem:[%s0 + $0x70] sm:$0xff]
  %v42 = vld [vmem:[%s0 + $0x78] sm:$0xff]
  %v43 = vld [vmem:[%s0 + $0x80] sm:$0xff]
  %v44 = vld [vmem:[%s0 + $0x88] sm:$0xff]
  %v45 = vld [vmem:[%s0 + $0x90] sm:$0xff]
  %v46 = vld [vmem:[%s0 + $0x98] sm:$0xff]
  %v47 = vld [vmem:[%s0 + $0xa0] sm:$0xff]
  %v48 = vld [vmem:[%s0 + $0xa8] sm:$0xff]
  %v49 = vld [vmem:[%s0 + $0xb0] sm:$0xff]
  %v50 = vld [vmem:[%s0 + $0xb8] sm:$0xff]
  %v51 = vld [vmem:[%s0 + $0xc0] sm:$0xff]
  %v52 = vld [vmem:[%s0 + $0xc8] sm:$0xff]
  %v53 = vld [vmem:[%s0 + $0xd0] sm:$0xff]
  %v54 = vld [vmem:[%s0 + $0xd8] sm:$0xff]
  %v55 = vld [vmem:[%s0 + $0xe0] sm:$0xff]
  %v56 = vld [vmem:[%s0 + $0xe8] sm:$0xff]
  %v57 = vld [vmem:[%s0 + $0xf0] sm:$0xff]
  %v58 = vld [vmem:[%s0 + $0xf8] sm:$0xff]
  %v59 = vpack.c.bf16 %v28, %v27
  %v60 = vpack.c.bf16 %v30, %v29
  %v61 = vpack.c.bf16 %v32, %v31
  %v62 = vpack.c.bf16 %v34, %v33
  %v63 = vpack.c.bf16 %v36, %v35
  %v64 = vpack.c.bf16 %v38, %v37
  %v65 = vpack.c.bf16 %v40, %v39
  %v66 = vpack.c.bf16 %v42, %v41
  %v67 = vpack.c.bf16 %v44, %v43
  %v68 = vpack.c.bf16 %v46, %v45
  %v69 = vpack.c.bf16 %v48, %v47
  %v70 = vpack.c.bf16 %v50, %v49
  %v71 = vpack.c.bf16 %v52, %v51
  %v72 = vpack.c.bf16 %v54, %v53
  %v73 = vpack.c.bf16 %v56, %v55
  %v74 = vpack.c.bf16 %v58, %v57
  %v75 = vld [vmem:[%s1] sm:$0xf]
  %v76 = vld [vmem:[%s1 + $0x4] sm:$0xf]
  %v77 = vld [vmem:[%s1 + $0x8] sm:$0xf]
  %v78 = vld [vmem:[%s1 + $0xc] sm:$0xf]
  %v79 = vld [vmem:[%s2] sm:$0x1]
  %v81 = vlaneseq
  %v82 = vshrl.u32 %v81, 7
  %v83 = vsub.s32 0, %v82
  %v84 = vrot.slane %v79, %v83
  %v90 = vunpack.c.l.b16 %v75
  %v91 = vunpack.c.l.b16 %v76
  %v92 = vunpack.c.l.b16 %v77
  %v93 = vunpack.c.l.b16 %v78
  %v94 = vpack.c.b16 %v91, %v90
  %v95 = vpack.c.b16 %v93, %v92
  %vm98 = vcmask 261120
  %v100 = vsel %vm98, %v59, 0
  %v103 = vsel %vm98, %v60, 0
  %v106 = vsel %vm98, %v61, 0
  %v109 = vsel %vm98, %v62, 0
  %v112 = vsel %vm98, %v63, 0
  %v115 = vsel %vm98, %v64, 0
  %v118 = vsel %vm98, %v65, 0
  %v121 = vsel %vm98, %v66, 0
  %v124 = vsel %vm98, %v67, 0
  %v127 = vsel %vm98, %v68, 0
  %v130 = vsel %vm98, %v69, 0
  %v133 = vsel %vm98, %v70, 0
  %v136 = vsel %vm98, %v71, 0
  %v139 = vsel %vm98, %v72, 0
  %v142 = vsel %vm98, %v73, 0
  %v145 = vsel %vm98, %v74, 0
  %147 = vmatprep.subr.bf16.mxu0 0
  %148 = vmatpush1.bf16.msra.mxu0 0
  %149 = vmatprep.subr.bf16.mxu0 0
  %150 = vmatpush1.bf16.msra.mxu0 0
  %151 = vmatprep.subr.bf16.mxu0 0
  %152 = vmatpush1.bf16.msra.mxu0 0
  %153 = vmatprep.subr.bf16.mxu0 0
  %154 = vmatpush1.bf16.msra.mxu0 0
  %155 = vmatprep.subr.bf16.mxu0 0
  %156 = vmatpush1.bf16.msra.mxu0 0
  %157 = vmatprep.subr.bf16.mxu0 0
  %158 = vmatpush1.bf16.msra.mxu0 0
  %159 = vmatprep.subr.bf16.mxu0 0
  %160 = vmatpush1.bf16.msra.mxu0 %v95
  %161 = vmatprep.subr.bf16.mxu0 0
  %162 = vmatpush1.bf16.msra.mxu0 %v94
  %163 = vmatprep.subr.bf16.mxu0 0
  %164 = vmatpush2.bf16.msra.mxu0 0
  %165 = vmatprep.subr.bf16.mxu0 0
  %166 = vmatpush2.bf16.msra.mxu0 0
  %167 = vmatprep.subr.bf16.mxu0 0
  %168 = vmatpush2.bf16.msra.mxu0 0
  %169 = vmatprep.subr.bf16.mxu0 0
  %170 = vmatpush2.bf16.msra.mxu0 0
  %171 = vmatprep.subr.bf16.mxu0 0
  %172 = vmatpush2.bf16.msra.mxu0 0
  %173 = vmatprep.subr.bf16.mxu0 0
  %174 = vmatpush2.bf16.msra.mxu0 0
  %175 = vmatprep.subr.bf16.mxu0 0
  %176 = vmatpush2.bf16.msra.mxu0 0
  %177 = vmatprep.subr.bf16.mxu0 0
  %178 = vmatpush2.bf16.msra.mxu0 0
  %179 = vmatprep.mubr.bf16.mxu0 0
  %180 = vmatmul.mubr.bf16.gmra.mxu0 %v100
  %v181 = vpop.f32.mrf.mxu0
  %v182 = vadd.f32 %v84, %v181
  %v183 = vpop.f32.mrf.mxu0
  %v184 = vpop.f32.mrf.mxu0
  %v185 = vadd.f32 %v84, %v184
  %v186 = vpop.f32.mrf.mxu0
  %187 = vmatprep.mubr.bf16.mxu0 0
  %188 = vmatmul.mubr.bf16.gmra.mxu0 %v103
  %v189 = vpop.f32.mrf.mxu0
  %v190 = vadd.f32 %v84, %v189
  %v191 = vpop.f32.mrf.mxu0
  %v192 = vpop.f32.mrf.mxu0
  %v193 = vadd.f32 %v84, %v192
  %v194 = vpop.f32.mrf.mxu0
  %195 = vmatprep.mubr.bf16.mxu0 0
  %196 = vmatmul.mubr.bf16.gmra.mxu0 %v106
  %v197 = vpop.f32.mrf.mxu0
  %v198 = vadd.f32 %v84, %v197
  %v199 = vpop.f32.mrf.mxu0
  %v200 = vpop.f32.mrf.mxu0
  %v201 = vadd.f32 %v84, %v200
  %v202 = vpop.f32.mrf.mxu0
  %203 = vmatprep.mubr.bf16.mxu0 0
  %204 = vmatmul.mubr.bf16.gmra.mxu0 %v109
  %v205 = vpop.f32.mrf.mxu0
  %v206 = vadd.f32 %v84, %v205
  %v207 = vpop.f32.mrf.mxu0
  %v208 = vpop.f32.mrf.mxu0
  %v209 = vadd.f32 %v84, %v208
  %v210 = vpop.f32.mrf.mxu0
  %211 = vmatprep.mubr.bf16.mxu0 0
  %212 = vmatmul.mubr.bf16.gmra.mxu0 %v112
  %v213 = vpop.f32.mrf.mxu0
  %v214 = vadd.f32 %v84, %v213
  %v215 = vpop.f32.mrf.mxu0
  %v216 = vpop.f32.mrf.mxu0
  %v217 = vadd.f32 %v84, %v216
  %v218 = vpop.f32.mrf.mxu0
  %219 = vmatprep.mubr.bf16.mxu0 0
  %220 = vmatmul.mubr.bf16.gmra.mxu0 %v115
  %v221 = vpop.f32.mrf.mxu0
  %v222 = vadd.f32 %v84, %v221
  %v223 = vpop.f32.mrf.mxu0
  %v224 = vpop.f32.mrf.mxu0
  %v225 = vadd.f32 %v84, %v224
  %v226 = vpop.f32.mrf.mxu0
  %227 = vmatprep.mubr.bf16.mxu0 0
  %228 = vmatmul.mubr.bf16.gmra.mxu0 %v118
  %v229 = vpop.f32.mrf.mxu0
  %v230 = vadd.f32 %v84, %v229
  %v231 = vpop.f32.mrf.mxu0
  %v232 = vpop.f32.mrf.mxu0
  %v233 = vadd.f32 %v84, %v232
  %v234 = vpop.f32.mrf.mxu0
  %235 = vmatprep.mubr.bf16.mxu0 0
  %236 = vmatmul.mubr.bf16.gmra.mxu0 %v121
  %v237 = vpop.f32.mrf.mxu0
  %v238 = vadd.f32 %v84, %v237
  %v239 = vpop.f32.mrf.mxu0
  %v240 = vpop.f32.mrf.mxu0
  %v241 = vadd.f32 %v84, %v240
  %v242 = vpop.f32.mrf.mxu0
  %243 = vmatprep.mubr.bf16.mxu0 0
  %244 = vmatmul.mubr.bf16.gmra.mxu0 %v124
  %v245 = vpop.f32.mrf.mxu0
  %v246 = vadd.f32 %v84, %v245
  %v247 = vpop.f32.mrf.mxu0
  %v248 = vpop.f32.mrf.mxu0
  %v249 = vadd.f32 %v84, %v248
  %v250 = vpop.f32.mrf.mxu0
  %251 = vmatprep.mubr.bf16.mxu0 0
  %252 = vmatmul.mubr.bf16.gmra.mxu0 %v127
  %v253 = vpop.f32.mrf.mxu0
  %v254 = vadd.f32 %v84, %v253
  %v255 = vpop.f32.mrf.mxu0
  %v256 = vpop.f32.mrf.mxu0
  %v257 = vadd.f32 %v84, %v256
  %v258 = vpop.f32.mrf.mxu0
  %259 = vmatprep.mubr.bf16.mxu0 0
  %260 = vmatmul.mubr.bf16.gmra.mxu0 %v130
  %v261 = vpop.f32.mrf.mxu0
  %v262 = vadd.f32 %v84, %v261
  %v263 = vpop.f32.mrf.mxu0
  %v264 = vpop.f32.mrf.mxu0
  %v265 = vadd.f32 %v84, %v264
  %v266 = vpop.f32.mrf.mxu0
  %267 = vmatprep.mubr.bf16.mxu0 0
  %268 = vmatmul.mubr.bf16.gmra.mxu0 %v133
  %v269 = vpop.f32.mrf.mxu0
  %v270 = vadd.f32 %v84, %v269
  %v271 = vpop.f32.mrf.mxu0
  %v272 = vpop.f32.mrf.mxu0
  %v273 = vadd.f32 %v84, %v272
  %v274 = vpop.f32.mrf.mxu0
  %275 = vmatprep.mubr.bf16.mxu0 0
  %276 = vmatmul.mubr.bf16.gmra.mxu0 %v136
  %v277 = vpop.f32.mrf.mxu0
  %v278 = vadd.f32 %v84, %v277
  %v279 = vpop.f32.mrf.mxu0
  %v280 = vpop.f32.mrf.mxu0
  %v281 = vadd.f32 %v84, %v280
  %v282 = vpop.f32.mrf.mxu0
  %283 = vmatprep.mubr.bf16.mxu0 0
  %284 = vmatmul.mubr.bf16.gmra.mxu0 %v139
  %v285 = vpop.f32.mrf.mxu0
  %v286 = vadd.f32 %v84, %v285
  %v287 = vpop.f32.mrf.mxu0
  %v288 = vpop.f32.mrf.mxu0
  %v289 = vadd.f32 %v84, %v288
  %v290 = vpop.f32.mrf.mxu0
  %291 = vmatprep.mubr.bf16.mxu0 0
  %292 = vmatmul.mubr.bf16.gmra.mxu0 %v142
  %v293 = vpop.f32.mrf.mxu0
  %v294 = vadd.f32 %v84, %v293
  %v295 = vpop.f32.mrf.mxu0
  %v296 = vpop.f32.mrf.mxu0
  %v297 = vadd.f32 %v84, %v296
  %v298 = vpop.f32.mrf.mxu0
  %299 = vmatprep.mubr.bf16.mxu0 0
  %300 = vmatmul.mubr.bf16.gmra.mxu0 %v145
  %v301 = vpop.f32.mrf.mxu0
  %v302 = vadd.f32 %v84, %v301
  %v303 = vpop.f32.mrf.mxu0
  %v304 = vpop.f32.mrf.mxu0
  %v305 = vadd.f32 %v84, %v304
  %v306 = vpop.f32.mrf.mxu0
  %307 = vdwg.mxu0
  %v308 = vmax.f32 %v182, 0.0
  %v309 = vmax.f32 %v185, 0.0
  %v310 = vmax.f32 %v190, 0.0
  %v311 = vmax.f32 %v193, 0.0
  %v312 = vmax.f32 %v198, 0.0
  %v313 = vmax.f32 %v201, 0.0
  %v314 = vmax.f32 %v206, 0.0
  %v315 = vmax.f32 %v209, 0.0
  %v316 = vmax.f32 %v214, 0.0
  %v317 = vmax.f32 %v217, 0.0
  %v318 = vmax.f32 %v222, 0.0
  %v319 = vmax.f32 %v225, 0.0
  %v320 = vmax.f32 %v230, 0.0
  %v321 = vmax.f32 %v233, 0.0
  %v322 = vmax.f32 %v238, 0.0
  %v323 = vmax.f32 %v241, 0.0
  %v324 = vmax.f32 %v246, 0.0
  %v325 = vmax.f32 %v249, 0.0
  %v326 = vmax.f32 %v254, 0.0
  %v327 = vmax.f32 %v257, 0.0
  %v328 = vmax.f32 %v262, 0.0
  %v329 = vmax.f32 %v265, 0.0
  %v330 = vmax.f32 %v270, 0.0
  %v331 = vmax.f32 %v273, 0.0
  %v332 = vmax.f32 %v278, 0.0
  %v333 = vmax.f32 %v281, 0.0
  %v334 = vmax.f32 %v286, 0.0
  %v335 = vmax.f32 %v289, 0.0
  %v336 = vmax.f32 %v294, 0.0
  %v337 = vmax.f32 %v297, 0.0
  %v338 = vmax.f32 %v302, 0.0
  %v339 = vmax.f32 %v305, 0.0
  %v340 = vpack.c.bf16 %v309, %v308
  %v341 = vpack.c.bf16 %v311, %v310
  %v342 = vpack.c.bf16 %v313, %v312
  %v343 = vpack.c.bf16 %v315, %v314
  %v344 = vpack.c.bf16 %v317, %v316
  %v345 = vpack.c.bf16 %v319, %v318
  %v346 = vpack.c.bf16 %v321, %v320
  %v347 = vpack.c.bf16 %v323, %v322
  %v348 = vpack.c.bf16 %v325, %v324
  %v349 = vpack.c.bf16 %v327, %v326
  %v350 = vpack.c.bf16 %v329, %v328
  %v351 = vpack.c.bf16 %v331, %v330
  %v352 = vpack.c.bf16 %v333, %v332
  %v353 = vpack.c.bf16 %v335, %v334
  %v354 = vpack.c.bf16 %v337, %v336
  %v355 = vpack.c.bf16 %v339, %v338
  %v356 = vld [vmem:[%s3] sm:$0xf]
  %v357 = vld [vmem:[%s3 + $0x4] sm:$0xf]
  %v358 = vld [vmem:[%s3 + $0x8] sm:$0xf]
  %v359 = vld [vmem:[%s3 + $0xc] sm:$0xf]
  %v360 = vld [vmem:[%s3 + $0x10] sm:$0xf]
  %v361 = vld [vmem:[%s3 + $0x14] sm:$0xf]
  %v362 = vld [vmem:[%s3 + $0x18] sm:$0xf]
  %v363 = vld [vmem:[%s3 + $0x1c] sm:$0xf]
  %v364 = vld [vmem:[%s3 + $0x20] sm:$0xf]
  %v365 = vld [vmem:[%s3 + $0x24] sm:$0xf]
  %v366 = vld [vmem:[%s3 + $0x28] sm:$0xf]
  %v367 = vld [vmem:[%s3 + $0x2c] sm:$0xf]
  %v368 = vld [vmem:[%s3 + $0x30] sm:$0xf]
  %v369 = vld [vmem:[%s3 + $0x34] sm:$0xf]
  %v370 = vld [vmem:[%s3 + $0x38] sm:$0xf]
  %v371 = vld [vmem:[%s3 + $0x3c] sm:$0xf]
  %v372 = vld [vmem:[%s4] sm:$0x1]
  %v374 = vlaneseq
  %v375 = vshrl.u32 %v374, 7
  %v376 = vsub.s32 0, %v375
  %v377 = vrot.slane %v372, %v376
  %v395 = vunpack.c.l.b16 %v356
  %v396 = vunpack.c.l.b16 %v357
  %v397 = vunpack.c.l.b16 %v358
  %v398 = vunpack.c.l.b16 %v359
  %v399 = vunpack.c.l.b16 %v360
  %v400 = vunpack.c.l.b16 %v361
  %v401 = vunpack.c.l.b16 %v362
  %v402 = vunpack.c.l.b16 %v363
  %v403 = vunpack.c.l.b16 %v364
  %v404 = vunpack.c.l.b16 %v365
  %v405 = vunpack.c.l.b16 %v366
  %v406 = vunpack.c.l.b16 %v367
  %v407 = vunpack.c.l.b16 %v368
  %v408 = vunpack.c.l.b16 %v369
  %v409 = vunpack.c.l.b16 %v370
  %v410 = vunpack.c.l.b16 %v371
  %v411 = vpack.c.b16 %v396, %v395
  %v412 = vpack.c.b16 %v398, %v397
  %v413 = vpack.c.b16 %v400, %v399
  %v414 = vpack.c.b16 %v402, %v401
  %v415 = vpack.c.b16 %v404, %v403
  %v416 = vpack.c.b16 %v406, %v405
  %v417 = vpack.c.b16 %v408, %v407
  %v418 = vpack.c.b16 %v410, %v409
  %427 = vmatprep.subr.bf16.mxu0 0
  %428 = vmatpush1.bf16.msra.mxu0 %v418
  %429 = vmatprep.subr.bf16.mxu0 0
  %430 = vmatpush1.bf16.msra.mxu0 %v417
  %431 = vmatprep.subr.bf16.mxu0 0
  %432 = vmatpush1.bf16.msra.mxu0 %v416
  %433 = vmatprep.subr.bf16.mxu0 0
  %434 = vmatpush1.bf16.msra.mxu0 %v415
  %435 = vmatprep.subr.bf16.mxu0 0
  %436 = vmatpush1.bf16.msra.mxu0 %v414
  %437 = vmatprep.subr.bf16.mxu0 0
  %438 = vmatpush1.bf16.msra.mxu0 %v413
  %439 = vmatprep.subr.bf16.mxu0 0
  %440 = vmatpush1.bf16.msra.mxu0 %v412
  %441 = vmatprep.subr.bf16.mxu0 0
  %442 = vmatpush1.bf16.msra.mxu0 %v411
  %443 = vmatprep.subr.bf16.mxu0 0
  %444 = vmatpush2.bf16.msra.mxu0 0
  %445 = vmatprep.subr.bf16.mxu0 0
  %446 = vmatpush2.bf16.msra.mxu0 0
  %447 = vmatprep.subr.bf16.mxu0 0
  %448 = vmatpush2.bf16.msra.mxu0 0
  %449 = vmatprep.subr.bf16.mxu0 0
  %450 = vmatpush2.bf16.msra.mxu0 0
  %451 = vmatprep.subr.bf16.mxu0 0
  %452 = vmatpush2.bf16.msra.mxu0 0
  %453 = vmatprep.subr.bf16.mxu0 0
  %454 = vmatpush2.bf16.msra.mxu0 0
  %455 = vmatprep.subr.bf16.mxu0 0
  %456 = vmatpush2.bf16.msra.mxu0 0
  %457 = vmatprep.subr.bf16.mxu0 0
  %458 = vmatpush2.bf16.msra.mxu0 0
  %459 = vmatprep.mubr.bf16.mxu0 0
  %460 = vmatmul.mubr.bf16.gmra.mxu0 %v340
  %v461 = vpop.f32.mrf.mxu0
  %v462 = vadd.f32 %v377, %v461
  %v463 = vpop.f32.mrf.mxu0
  %v464 = vpop.f32.mrf.mxu0
  %v465 = vadd.f32 %v377, %v464
  %v466 = vpop.f32.mrf.mxu0
  %467 = vmatprep.mubr.bf16.mxu0 0
  %468 = vmatmul.mubr.bf16.gmra.mxu0 %v341
  %v469 = vpop.f32.mrf.mxu0
  %v470 = vadd.f32 %v377, %v469
  %v471 = vpop.f32.mrf.mxu0
  %v472 = vpop.f32.mrf.mxu0
  %v473 = vadd.f32 %v377, %v472
  %v474 = vpop.f32.mrf.mxu0
  %475 = vmatprep.mubr.bf16.mxu0 0
  %476 = vmatmul.mubr.bf16.gmra.mxu0 %v342
  %v477 = vpop.f32.mrf.mxu0
  %v478 = vadd.f32 %v377, %v477
  %v479 = vpop.f32.mrf.mxu0
  %v480 = vpop.f32.mrf.mxu0
  %v481 = vadd.f32 %v377, %v480
  %v482 = vpop.f32.mrf.mxu0
  %483 = vmatprep.mubr.bf16.mxu0 0
  %484 = vmatmul.mubr.bf16.gmra.mxu0 %v343
  %v485 = vpop.f32.mrf.mxu0
  %v486 = vadd.f32 %v377, %v485
  %v487 = vpop.f32.mrf.mxu0
  %v488 = vpop.f32.mrf.mxu0
  %v489 = vadd.f32 %v377, %v488
  %v490 = vpop.f32.mrf.mxu0
  %491 = vmatprep.mubr.bf16.mxu0 0
  %492 = vmatmul.mubr.bf16.gmra.mxu0 %v344
  %v493 = vpop.f32.mrf.mxu0
  %v494 = vadd.f32 %v377, %v493
  %v495 = vpop.f32.mrf.mxu0
  %v496 = vpop.f32.mrf.mxu0
  %v497 = vadd.f32 %v377, %v496
  %v498 = vpop.f32.mrf.mxu0
  %499 = vmatprep.mubr.bf16.mxu0 0
  %500 = vmatmul.mubr.bf16.gmra.mxu0 %v345
  %v501 = vpop.f32.mrf.mxu0
  %v502 = vadd.f32 %v377, %v501
  %v503 = vpop.f32.mrf.mxu0
  %v504 = vpop.f32.mrf.mxu0
  %v505 = vadd.f32 %v377, %v504
  %v506 = vpop.f32.mrf.mxu0
  %507 = vmatprep.mubr.bf16.mxu0 0
  %508 = vmatmul.mubr.bf16.gmra.mxu0 %v346
  %v509 = vpop.f32.mrf.mxu0
  %v510 = vadd.f32 %v377, %v509
  %v511 = vpop.f32.mrf.mxu0
  %v512 = vpop.f32.mrf.mxu0
  %v513 = vadd.f32 %v377, %v512
  %v514 = vpop.f32.mrf.mxu0
  %515 = vmatprep.mubr.bf16.mxu0 0
  %516 = vmatmul.mubr.bf16.gmra.mxu0 %v347
  %v517 = vpop.f32.mrf.mxu0
  %v518 = vadd.f32 %v377, %v517
  %v519 = vpop.f32.mrf.mxu0
  %v520 = vpop.f32.mrf.mxu0
  %v521 = vadd.f32 %v377, %v520
  %v522 = vpop.f32.mrf.mxu0
  %523 = vmatprep.mubr.bf16.mxu0 0
  %524 = vmatmul.mubr.bf16.gmra.mxu0 %v348
  %v525 = vpop.f32.mrf.mxu0
  %v526 = vadd.f32 %v377, %v525
  %v527 = vpop.f32.mrf.mxu0
  %v528 = vpop.f32.mrf.mxu0
  %v529 = vadd.f32 %v377, %v528
  %v530 = vpop.f32.mrf.mxu0
  %531 = vmatprep.mubr.bf16.mxu0 0
  %532 = vmatmul.mubr.bf16.gmra.mxu0 %v349
  %v533 = vpop.f32.mrf.mxu0
  %v534 = vadd.f32 %v377, %v533
  %v535 = vpop.f32.mrf.mxu0
  %v536 = vpop.f32.mrf.mxu0
  %v537 = vadd.f32 %v377, %v536
  %v538 = vpop.f32.mrf.mxu0
  %539 = vmatprep.mubr.bf16.mxu0 0
  %540 = vmatmul.mubr.bf16.gmra.mxu0 %v350
  %v541 = vpop.f32.mrf.mxu0
  %v542 = vadd.f32 %v377, %v541
  %v543 = vpop.f32.mrf.mxu0
  %v544 = vpop.f32.mrf.mxu0
  %v545 = vadd.f32 %v377, %v544
  %v546 = vpop.f32.mrf.mxu0
  %547 = vmatprep.mubr.bf16.mxu0 0
  %548 = vmatmul.mubr.bf16.gmra.mxu0 %v351
  %v549 = vpop.f32.mrf.mxu0
  %v550 = vadd.f32 %v377, %v549
  %v551 = vpop.f32.mrf.mxu0
  %v552 = vpop.f32.mrf.mxu0
  %v553 = vadd.f32 %v377, %v552
  %v554 = vpop.f32.mrf.mxu0
  %555 = vmatprep.mubr.bf16.mxu0 0
  %556 = vmatmul.mubr.bf16.gmra.mxu0 %v352
  %v557 = vpop.f32.mrf.mxu0
  %v558 = vadd.f32 %v377, %v557
  %v559 = vpop.f32.mrf.mxu0
  %v560 = vpop.f32.mrf.mxu0
  %v561 = vadd.f32 %v377, %v560
  %v562 = vpop.f32.mrf.mxu0
  %563 = vmatprep.mubr.bf16.mxu0 0
  %564 = vmatmul.mubr.bf16.gmra.mxu0 %v353
  %v565 = vpop.f32.mrf.mxu0
  %v566 = vadd.f32 %v377, %v565
  %v567 = vpop.f32.mrf.mxu0
  %v568 = vpop.f32.mrf.mxu0
  %v569 = vadd.f32 %v377, %v568
  %v570 = vpop.f32.mrf.mxu0
  %571 = vmatprep.mubr.bf16.mxu0 0
  %572 = vmatmul.mubr.bf16.gmra.mxu0 %v354
  %v573 = vpop.f32.mrf.mxu0
  %v574 = vadd.f32 %v377, %v573
  %v575 = vpop.f32.mrf.mxu0
  %v576 = vpop.f32.mrf.mxu0
  %v577 = vadd.f32 %v377, %v576
  %v578 = vpop.f32.mrf.mxu0
  %579 = vmatprep.mubr.bf16.mxu0 0
  %580 = vmatmul.mubr.bf16.gmra.mxu0 %v355
  %v581 = vpop.f32.mrf.mxu0
  %v582 = vadd.f32 %v377, %v581
  %v583 = vpop.f32.mrf.mxu0
  %v584 = vpop.f32.mrf.mxu0
  %v585 = vadd.f32 %v377, %v584
  %v586 = vpop.f32.mrf.mxu0
  %587 = vdwg.mxu0
  %v588 = vmax.f32 %v462, 0.0
  %v589 = vmax.f32 %v465, 0.0
  %v590 = vmax.f32 %v470, 0.0
  %v591 = vmax.f32 %v473, 0.0
  %v592 = vmax.f32 %v478, 0.0
  %v593 = vmax.f32 %v481, 0.0
  %v594 = vmax.f32 %v486, 0.0
  %v595 = vmax.f32 %v489, 0.0
  %v596 = vmax.f32 %v494, 0.0
  %v597 = vmax.f32 %v497, 0.0
  %v598 = vmax.f32 %v502, 0.0
  %v599 = vmax.f32 %v505, 0.0
  %v600 = vmax.f32 %v510, 0.0
  %v601 = vmax.f32 %v513, 0.0
  %v602 = vmax.f32 %v518, 0.0
  %v603 = vmax.f32 %v521, 0.0
  %v604 = vmax.f32 %v526, 0.0
  %v605 = vmax.f32 %v529, 0.0
  %v606 = vmax.f32 %v534, 0.0
  %v607 = vmax.f32 %v537, 0.0
  %v608 = vmax.f32 %v542, 0.0
  %v609 = vmax.f32 %v545, 0.0
  %v610 = vmax.f32 %v550, 0.0
  %v611 = vmax.f32 %v553, 0.0
  %v612 = vmax.f32 %v558, 0.0
  %v613 = vmax.f32 %v561, 0.0
  %v614 = vmax.f32 %v566, 0.0
  %v615 = vmax.f32 %v569, 0.0
  %v616 = vmax.f32 %v574, 0.0
  %v617 = vmax.f32 %v577, 0.0
  %v618 = vmax.f32 %v582, 0.0
  %v619 = vmax.f32 %v585, 0.0
  %v620 = vpack.c.bf16 %v589, %v588
  %v621 = vpack.c.bf16 %v591, %v590
  %v622 = vpack.c.bf16 %v593, %v592
  %v623 = vpack.c.bf16 %v595, %v594
  %v624 = vpack.c.bf16 %v597, %v596
  %v625 = vpack.c.bf16 %v599, %v598
  %v626 = vpack.c.bf16 %v601, %v600
  %v627 = vpack.c.bf16 %v603, %v602
  %v628 = vpack.c.bf16 %v605, %v604
  %v629 = vpack.c.bf16 %v607, %v606
  %v630 = vpack.c.bf16 %v609, %v608
  %v631 = vpack.c.bf16 %v611, %v610
  %v632 = vpack.c.bf16 %v613, %v612
  %v633 = vpack.c.bf16 %v615, %v614
  %v634 = vpack.c.bf16 %v617, %v616
  %v635 = vpack.c.bf16 %v619, %v618
  %v636 = vld [vmem:[%s5] sm:$0xf]
  %v637 = vld [vmem:[%s5 + $0x4] sm:$0xf]
  %v638 = vld [vmem:[%s5 + $0x8] sm:$0xf]
  %v639 = vld [vmem:[%s5 + $0xc] sm:$0xf]
  %v640 = vld [vmem:[%s5 + $0x10] sm:$0xf]
  %v641 = vld [vmem:[%s5 + $0x14] sm:$0xf]
  %v642 = vld [vmem:[%s5 + $0x18] sm:$0xf]
  %v643 = vld [vmem:[%s5 + $0x1c] sm:$0xf]
  %v644 = vld [vmem:[%s5 + $0x20] sm:$0xf]
  %v645 = vld [vmem:[%s5 + $0x24] sm:$0xf]
  %v646 = vld [vmem:[%s5 + $0x28] sm:$0xf]
  %v647 = vld [vmem:[%s5 + $0x2c] sm:$0xf]
  %v648 = vld [vmem:[%s5 + $0x30] sm:$0xf]
  %v649 = vld [vmem:[%s5 + $0x34] sm:$0xf]
  %v650 = vld [vmem:[%s5 + $0x38] sm:$0xf]
  %v651 = vld [vmem:[%s5 + $0x3c] sm:$0xf]
  %v652 = vld [vmem:[%s6] sm:$0x1]
  %v654 = vlaneseq
  %v655 = vshrl.u32 %v654, 7
  %v656 = vsub.s32 0, %v655
  %v657 = vrot.slane %v652, %v656
  %v675 = vunpack.c.l.b16 %v636
  %v676 = vunpack.c.l.b16 %v637
  %v677 = vunpack.c.l.b16 %v638
  %v678 = vunpack.c.l.b16 %v639
  %v679 = vunpack.c.l.b16 %v640
  %v680 = vunpack.c.l.b16 %v641
  %v681 = vunpack.c.l.b16 %v642
  %v682 = vunpack.c.l.b16 %v643
  %v683 = vunpack.c.l.b16 %v644
  %v684 = vunpack.c.l.b16 %v645
  %v685 = vunpack.c.l.b16 %v646
  %v686 = vunpack.c.l.b16 %v647
  %v687 = vunpack.c.l.b16 %v648
  %v688 = vunpack.c.l.b16 %v649
  %v689 = vunpack.c.l.b16 %v650
  %v690 = vunpack.c.l.b16 %v651
  %v691 = vpack.c.b16 %v676, %v675
  %v692 = vpack.c.b16 %v678, %v677
  %v693 = vpack.c.b16 %v680, %v679
  %v694 = vpack.c.b16 %v682, %v681
  %v695 = vpack.c.b16 %v684, %v683
  %v696 = vpack.c.b16 %v686, %v685
  %v697 = vpack.c.b16 %v688, %v687
  %v698 = vpack.c.b16 %v690, %v689
  %707 = vmatprep.subr.bf16.mxu0 0
  %708 = vmatpush1.bf16.msra.mxu0 %v698
  %709 = vmatprep.subr.bf16.mxu0 0
  %710 = vmatpush1.bf16.msra.mxu0 %v697
  %711 = vmatprep.subr.bf16.mxu0 0
  %712 = vmatpush1.bf16.msra.mxu0 %v696
  %713 = vmatprep.subr.bf16.mxu0 0
  %714 = vmatpush1.bf16.msra.mxu0 %v695
  %715 = vmatprep.subr.bf16.mxu0 0
  %716 = vmatpush1.bf16.msra.mxu0 %v694
  %717 = vmatprep.subr.bf16.mxu0 0
  %718 = vmatpush1.bf16.msra.mxu0 %v693
  %719 = vmatprep.subr.bf16.mxu0 0
  %720 = vmatpush1.bf16.msra.mxu0 %v692
  %721 = vmatprep.subr.bf16.mxu0 0
  %722 = vmatpush1.bf16.msra.mxu0 %v691
  %723 = vmatprep.subr.bf16.mxu0 0
  %724 = vmatpush2.bf16.msra.mxu0 0
  %725 = vmatprep.subr.bf16.mxu0 0
  %726 = vmatpush2.bf16.msra.mxu0 0
  %727 = vmatprep.subr.bf16.mxu0 0
  %728 = vmatpush2.bf16.msra.mxu0 0
  %729 = vmatprep.subr.bf16.mxu0 0
  %730 = vmatpush2.bf16.msra.mxu0 0
  %731 = vmatprep.subr.bf16.mxu0 0
  %732 = vmatpush2.bf16.msra.mxu0 0
  %733 = vmatprep.subr.bf16.mxu0 0
  %734 = vmatpush2.bf16.msra.mxu0 0
  %735 = vmatprep.subr.bf16.mxu0 0
  %736 = vmatpush2.bf16.msra.mxu0 0
  %737 = vmatprep.subr.bf16.mxu0 0
  %738 = vmatpush2.bf16.msra.mxu0 0
  %739 = vmatprep.mubr.bf16.mxu0 0
  %740 = vmatmul.mubr.bf16.gmra.mxu0 %v620
  %v741 = vpop.f32.mrf.mxu0
  %v742 = vadd.f32 %v657, %v741
  %v743 = vpop.f32.mrf.mxu0
  %v744 = vpop.f32.mrf.mxu0
  %v745 = vadd.f32 %v657, %v744
  %v746 = vpop.f32.mrf.mxu0
  %747 = vmatprep.mubr.bf16.mxu0 0
  %748 = vmatmul.mubr.bf16.gmra.mxu0 %v621
  %v749 = vpop.f32.mrf.mxu0
  %v750 = vadd.f32 %v657, %v749
  %v751 = vpop.f32.mrf.mxu0
  %v752 = vpop.f32.mrf.mxu0
  %v753 = vadd.f32 %v657, %v752
  %v754 = vpop.f32.mrf.mxu0
  %755 = vmatprep.mubr.bf16.mxu0 0
  %756 = vmatmul.mubr.bf16.gmra.mxu0 %v622
  %v757 = vpop.f32.mrf.mxu0
  %v758 = vadd.f32 %v657, %v757
  %v759 = vpop.f32.mrf.mxu0
  %v760 = vpop.f32.mrf.mxu0
  %v761 = vadd.f32 %v657, %v760
  %v762 = vpop.f32.mrf.mxu0
  %763 = vmatprep.mubr.bf16.mxu0 0
  %764 = vmatmul.mubr.bf16.gmra.mxu0 %v623
  %v765 = vpop.f32.mrf.mxu0
  %v766 = vadd.f32 %v657, %v765
  %v767 = vpop.f32.mrf.mxu0
  %v768 = vpop.f32.mrf.mxu0
  %v769 = vadd.f32 %v657, %v768
  %v770 = vpop.f32.mrf.mxu0
  %771 = vmatprep.mubr.bf16.mxu0 0
  %772 = vmatmul.mubr.bf16.gmra.mxu0 %v624
  %v773 = vpop.f32.mrf.mxu0
  %v774 = vadd.f32 %v657, %v773
  %v775 = vpop.f32.mrf.mxu0
  %v776 = vpop.f32.mrf.mxu0
  %v777 = vadd.f32 %v657, %v776
  %v778 = vpop.f32.mrf.mxu0
  %779 = vmatprep.mubr.bf16.mxu0 0
  %780 = vmatmul.mubr.bf16.gmra.mxu0 %v625
  %v781 = vpop.f32.mrf.mxu0
  %v782 = vadd.f32 %v657, %v781
  %v783 = vpop.f32.mrf.mxu0
  %v784 = vpop.f32.mrf.mxu0
  %v785 = vadd.f32 %v657, %v784
  %v786 = vpop.f32.mrf.mxu0
  %787 = vmatprep.mubr.bf16.mxu0 0
  %788 = vmatmul.mubr.bf16.gmra.mxu0 %v626
  %v789 = vpop.f32.mrf.mxu0
  %v790 = vadd.f32 %v657, %v789
  %v791 = vpop.f32.mrf.mxu0
  %v792 = vpop.f32.mrf.mxu0
  %v793 = vadd.f32 %v657, %v792
  %v794 = vpop.f32.mrf.mxu0
  %795 = vmatprep.mubr.bf16.mxu0 0
  %796 = vmatmul.mubr.bf16.gmra.mxu0 %v627
  %v797 = vpop.f32.mrf.mxu0
  %v798 = vadd.f32 %v657, %v797
  %v799 = vpop.f32.mrf.mxu0
  %v800 = vpop.f32.mrf.mxu0
  %v801 = vadd.f32 %v657, %v800
  %v802 = vpop.f32.mrf.mxu0
  %803 = vmatprep.mubr.bf16.mxu0 0
  %804 = vmatmul.mubr.bf16.gmra.mxu0 %v628
  %v805 = vpop.f32.mrf.mxu0
  %v806 = vadd.f32 %v657, %v805
  %v807 = vpop.f32.mrf.mxu0
  %v808 = vpop.f32.mrf.mxu0
  %v809 = vadd.f32 %v657, %v808
  %v810 = vpop.f32.mrf.mxu0
  %811 = vmatprep.mubr.bf16.mxu0 0
  %812 = vmatmul.mubr.bf16.gmra.mxu0 %v629
  %v813 = vpop.f32.mrf.mxu0
  %v814 = vadd.f32 %v657, %v813
  %v815 = vpop.f32.mrf.mxu0
  %v816 = vpop.f32.mrf.mxu0
  %v817 = vadd.f32 %v657, %v816
  %v818 = vpop.f32.mrf.mxu0
  %819 = vmatprep.mubr.bf16.mxu0 0
  %820 = vmatmul.mubr.bf16.gmra.mxu0 %v630
  %v821 = vpop.f32.mrf.mxu0
  %v822 = vadd.f32 %v657, %v821
  %v823 = vpop.f32.mrf.mxu0
  %v824 = vpop.f32.mrf.mxu0
  %v825 = vadd.f32 %v657, %v824
  %v826 = vpop.f32.mrf.mxu0
  %827 = vmatprep.mubr.bf16.mxu0 0
  %828 = vmatmul.mubr.bf16.gmra.mxu0 %v631
  %v829 = vpop.f32.mrf.mxu0
  %v830 = vadd.f32 %v657, %v829
  %v831 = vpop.f32.mrf.mxu0
  %v832 = vpop.f32.mrf.mxu0
  %v833 = vadd.f32 %v657, %v832
  %v834 = vpop.f32.mrf.mxu0
  %835 = vmatprep.mubr.bf16.mxu0 0
  %836 = vmatmul.mubr.bf16.gmra.mxu0 %v632
  %v837 = vpop.f32.mrf.mxu0
  %v838 = vadd.f32 %v657, %v837
  %v839 = vpop.f32.mrf.mxu0
  %v840 = vpop.f32.mrf.mxu0
  %v841 = vadd.f32 %v657, %v840
  %v842 = vpop.f32.mrf.mxu0
  %843 = vmatprep.mubr.bf16.mxu0 0
  %844 = vmatmul.mubr.bf16.gmra.mxu0 %v633
  %v845 = vpop.f32.mrf.mxu0
  %v846 = vadd.f32 %v657, %v845
  %v847 = vpop.f32.mrf.mxu0
  %v848 = vpop.f32.mrf.mxu0
  %v849 = vadd.f32 %v657, %v848
  %v850 = vpop.f32.mrf.mxu0
  %851 = vmatprep.mubr.bf16.mxu0 0
  %852 = vmatmul.mubr.bf16.gmra.mxu0 %v634
  %v853 = vpop.f32.mrf.mxu0
  %v854 = vadd.f32 %v657, %v853
  %v855 = vpop.f32.mrf.mxu0
  %v856 = vpop.f32.mrf.mxu0
  %v857 = vadd.f32 %v657, %v856
  %v858 = vpop.f32.mrf.mxu0
  %859 = vmatprep.mubr.bf16.mxu0 0
  %860 = vmatmul.mubr.bf16.gmra.mxu0 %v635
  %v861 = vpop.f32.mrf.mxu0
  %v862 = vadd.f32 %v657, %v861
  %v863 = vpop.f32.mrf.mxu0
  %v864 = vpop.f32.mrf.mxu0
  %v865 = vadd.f32 %v657, %v864
  %v866 = vpop.f32.mrf.mxu0
  %867 = vdwg.mxu0
  %v868 = vlaneseq
  %v869 = vand.u32 %v868, 127
  %vm870 = vcmp.lt.s32.totalorder %v869, 8
  %v871 = vsel %vm870, %v742, -inf
  %v872 = vsel %vm870, %v745, -inf
  %v873 = vsel %vm870, %v750, -inf
  %v874 = vsel %vm870, %v753, -inf
  %v875 = vsel %vm870, %v758, -inf
  %v876 = vsel %vm870, %v761, -inf
  %v877 = vsel %vm870, %v766, -inf
  %v878 = vsel %vm870, %v769, -inf
  %v879 = vsel %vm870, %v774, -inf
  %v880 = vsel %vm870, %v777, -inf
  %v881 = vsel %vm870, %v782, -inf
  %v882 = vsel %vm870, %v785, -inf
  %v883 = vsel %vm870, %v790, -inf
  %v884 = vsel %vm870, %v793, -inf
  %v885 = vsel %vm870, %v798, -inf
  %v886 = vsel %vm870, %v801, -inf
  %v887 = vsel %vm870, %v806, -inf
  %v888 = vsel %vm870, %v809, -inf
  %v889 = vsel %vm870, %v814, -inf
  %v890 = vsel %vm870, %v817, -inf
  %v891 = vsel %vm870, %v822, -inf
  %v892 = vsel %vm870, %v825, -inf
  %v893 = vsel %vm870, %v830, -inf
  %v894 = vsel %vm870, %v833, -inf
  %v895 = vsel %vm870, %v838, -inf
  %v896 = vsel %vm870, %v841, -inf
  %v897 = vsel %vm870, %v846, -inf
  %v898 = vsel %vm870, %v849, -inf
  %v899 = vsel %vm870, %v854, -inf
  %v900 = vsel %vm870, %v857, -inf
  %v901 = vsel %vm870, %v862, -inf
  %v902 = vsel %vm870, %v865, -inf
  %903 = vmax.xlane.f32.xlu0 %v871
  %v904 = vpop.xlane.xlu0 %903
  %905 = vmax.xlane.f32.xlu0 %v872
  %v906 = vpop.xlane.xlu0 %905
  %907 = vmax.xlane.f32.xlu0 %v873
  %v908 = vpop.xlane.xlu0 %907
  %909 = vmax.xlane.f32.xlu0 %v874
  %v910 = vpop.xlane.xlu0 %909
  %911 = vmax.xlane.f32.xlu0 %v875
  %v912 = vpop.xlane.xlu0 %911
  %913 = vmax.xlane.f32.xlu0 %v876
  %v914 = vpop.xlane.xlu0 %913
  %915 = vmax.xlane.f32.xlu0 %v877
  %v916 = vpop.xlane.xlu0 %915
  %917 = vmax.xlane.f32.xlu0 %v878
  %v918 = vpop.xlane.xlu0 %917
  %919 = vmax.xlane.f32.xlu0 %v879
  %v920 = vpop.xlane.xlu0 %919
  %921 = vmax.xlane.f32.xlu0 %v880
  %v922 = vpop.xlane.xlu0 %921
  %923 = vmax.xlane.f32.xlu0 %v881
  %v924 = vpop.xlane.xlu0 %923
  %925 = vmax.xlane.f32.xlu0 %v882
  %v926 = vpop.xlane.xlu0 %925
  %927 = vmax.xlane.f32.xlu0 %v883
  %v928 = vpop.xlane.xlu0 %927
  %929 = vmax.xlane.f32.xlu0 %v884
  %v930 = vpop.xlane.xlu0 %929
  %931 = vmax.xlane.f32.xlu0 %v885
  %v932 = vpop.xlane.xlu0 %931
  %933 = vmax.xlane.f32.xlu0 %v886
  %v934 = vpop.xlane.xlu0 %933
  %935 = vmax.xlane.f32.xlu0 %v887
  %v936 = vpop.xlane.xlu0 %935
  %937 = vmax.xlane.f32.xlu0 %v888
  %v938 = vpop.xlane.xlu0 %937
  %939 = vmax.xlane.f32.xlu0 %v889
  %v940 = vpop.xlane.xlu0 %939
  %941 = vmax.xlane.f32.xlu0 %v890
  %v942 = vpop.xlane.xlu0 %941
  %943 = vmax.xlane.f32.xlu0 %v891
  %v944 = vpop.xlane.xlu0 %943
  %945 = vmax.xlane.f32.xlu0 %v892
  %v946 = vpop.xlane.xlu0 %945
  %947 = vmax.xlane.f32.xlu0 %v893
  %v948 = vpop.xlane.xlu0 %947
  %949 = vmax.xlane.f32.xlu0 %v894
  %v950 = vpop.xlane.xlu0 %949
  %951 = vmax.xlane.f32.xlu0 %v895
  %v952 = vpop.xlane.xlu0 %951
  %953 = vmax.xlane.f32.xlu0 %v896
  %v954 = vpop.xlane.xlu0 %953
  %955 = vmax.xlane.f32.xlu0 %v897
  %v956 = vpop.xlane.xlu0 %955
  %957 = vmax.xlane.f32.xlu0 %v898
  %v958 = vpop.xlane.xlu0 %957
  %959 = vmax.xlane.f32.xlu0 %v899
  %v960 = vpop.xlane.xlu0 %959
  %961 = vmax.xlane.f32.xlu0 %v900
  %v962 = vpop.xlane.xlu0 %961
  %963 = vmax.xlane.f32.xlu0 %v901
  %v964 = vpop.xlane.xlu0 %963
  %965 = vmax.xlane.f32.xlu0 %v902
  %v966 = vpop.xlane.xlu0 %965
  %v967 = vsub.f32 %v742, %v904
  %v968 = vsub.f32 %v745, %v906
  %v969 = vsub.f32 %v750, %v908
  %v970 = vsub.f32 %v753, %v910
  %v971 = vsub.f32 %v758, %v912
  %v972 = vsub.f32 %v761, %v914
  %v973 = vsub.f32 %v766, %v916
  %v974 = vsub.f32 %v769, %v918
  %v975 = vsub.f32 %v774, %v920
  %v976 = vsub.f32 %v777, %v922
  %v977 = vsub.f32 %v782, %v924
  %v978 = vsub.f32 %v785, %v926
  %v979 = vsub.f32 %v790, %v928
  %v980 = vsub.f32 %v793, %v930
  %v981 = vsub.f32 %v798, %v932
  %v982 = vsub.f32 %v801, %v934
  %v983 = vsub.f32 %v806, %v936
  %v984 = vsub.f32 %v809, %v938
  %v985 = vsub.f32 %v814, %v940
  %v986 = vsub.f32 %v817, %v942
  %v987 = vsub.f32 %v822, %v944
  %v988 = vsub.f32 %v825, %v946
  %v989 = vsub.f32 %v830, %v948
  %v990 = vsub.f32 %v833, %v950
  %v991 = vsub.f32 %v838, %v952
  %v992 = vsub.f32 %v841, %v954
  %v993 = vsub.f32 %v846, %v956
  %v994 = vsub.f32 %v849, %v958
  %v995 = vsub.f32 %v854, %v960
  %v996 = vsub.f32 %v857, %v962
  %v997 = vsub.f32 %v862, %v964
  %v998 = vsub.f32 %v865, %v966
  %v999 = vmul.f32 %v967, 1.442695
  %v1000 = vpow.pop %v999
  %v1001 = vmul.f32 %v968, 1.442695
  %v1002 = vpow.pop %v1001
  %v1003 = vmul.f32 %v969, 1.442695
  %v1004 = vpow.pop %v1003
  %v1005 = vmul.f32 %v970, 1.442695
  %v1006 = vpow.pop %v1005
  %v1007 = vmul.f32 %v971, 1.442695
  %v1008 = vpow.pop %v1007
  %v1009 = vmul.f32 %v972, 1.442695
  %v1010 = vpow.pop %v1009
  %v1011 = vmul.f32 %v973, 1.442695
  %v1012 = vpow.pop %v1011
  %v1013 = vmul.f32 %v974, 1.442695
  %v1014 = vpow.pop %v1013
  %v1015 = vmul.f32 %v975, 1.442695
  %v1016 = vpow.pop %v1015
  %v1017 = vmul.f32 %v976, 1.442695
  %v1018 = vpow.pop %v1017
  %v1019 = vmul.f32 %v977, 1.442695
  %v1020 = vpow.pop %v1019
  %v1021 = vmul.f32 %v978, 1.442695
  %v1022 = vpow.pop %v1021
  %v1023 = vmul.f32 %v979, 1.442695
  %v1024 = vpow.pop %v1023
  %v1025 = vmul.f32 %v980, 1.442695
  %v1026 = vpow.pop %v1025
  %v1027 = vmul.f32 %v981, 1.442695
  %v1028 = vpow.pop %v1027
  %v1029 = vmul.f32 %v982, 1.442695
  %v1030 = vpow.pop %v1029
  %v1031 = vmul.f32 %v983, 1.442695
  %v1032 = vpow.pop %v1031
  %v1033 = vmul.f32 %v984, 1.442695
  %v1034 = vpow.pop %v1033
  %v1035 = vmul.f32 %v985, 1.442695
  %v1036 = vpow.pop %v1035
  %v1037 = vmul.f32 %v986, 1.442695
  %v1038 = vpow.pop %v1037
  %v1039 = vmul.f32 %v987, 1.442695
  %v1040 = vpow.pop %v1039
  %v1041 = vmul.f32 %v988, 1.442695
  %v1042 = vpow.pop %v1041
  %v1043 = vmul.f32 %v989, 1.442695
  %v1044 = vpow.pop %v1043
  %v1045 = vmul.f32 %v990, 1.442695
  %v1046 = vpow.pop %v1045
  %v1047 = vmul.f32 %v991, 1.442695
  %v1048 = vpow.pop %v1047
  %v1049 = vmul.f32 %v992, 1.442695
  %v1050 = vpow.pop %v1049
  %v1051 = vmul.f32 %v993, 1.442695
  %v1052 = vpow.pop %v1051
  %v1053 = vmul.f32 %v994, 1.442695
  %v1054 = vpow.pop %v1053
  %v1055 = vmul.f32 %v995, 1.442695
  %v1056 = vpow.pop %v1055
  %v1057 = vmul.f32 %v996, 1.442695
  %v1058 = vpow.pop %v1057
  %v1059 = vmul.f32 %v997, 1.442695
  %v1060 = vpow.pop %v1059
  %v1061 = vmul.f32 %v998, 1.442695
  %v1062 = vpow.pop %v1061
  %v1063 = vsel %vm870, %v1000, 0.0
  %v1064 = vsel %vm870, %v1002, 0.0
  %v1065 = vsel %vm870, %v1004, 0.0
  %v1066 = vsel %vm870, %v1006, 0.0
  %v1067 = vsel %vm870, %v1008, 0.0
  %v1068 = vsel %vm870, %v1010, 0.0
  %v1069 = vsel %vm870, %v1012, 0.0
  %v1070 = vsel %vm870, %v1014, 0.0
  %v1071 = vsel %vm870, %v1016, 0.0
  %v1072 = vsel %vm870, %v1018, 0.0
  %v1073 = vsel %vm870, %v1020, 0.0
  %v1074 = vsel %vm870, %v1022, 0.0
  %v1075 = vsel %vm870, %v1024, 0.0
  %v1076 = vsel %vm870, %v1026, 0.0
  %v1077 = vsel %vm870, %v1028, 0.0
  %v1078 = vsel %vm870, %v1030, 0.0
  %v1079 = vsel %vm870, %v1032, 0.0
  %v1080 = vsel %vm870, %v1034, 0.0
  %v1081 = vsel %vm870, %v1036, 0.0
  %v1082 = vsel %vm870, %v1038, 0.0
  %v1083 = vsel %vm870, %v1040, 0.0
  %v1084 = vsel %vm870, %v1042, 0.0
  %v1085 = vsel %vm870, %v1044, 0.0
  %v1086 = vsel %vm870, %v1046, 0.0
  %v1087 = vsel %vm870, %v1048, 0.0
  %v1088 = vsel %vm870, %v1050, 0.0
  %v1089 = vsel %vm870, %v1052, 0.0
  %v1090 = vsel %vm870, %v1054, 0.0
  %v1091 = vsel %vm870, %v1056, 0.0
  %v1092 = vsel %vm870, %v1058, 0.0
  %v1093 = vsel %vm870, %v1060, 0.0
  %v1094 = vsel %vm870, %v1062, 0.0
  %1095 = vadd.xlane.f32.xlu0 %v1063
  %v1096 = vpop.xlane.xlu0 %1095
  %1097 = vadd.xlane.f32.xlu0 %v1064
  %v1098 = vpop.xlane.xlu0 %1097
  %1099 = vadd.xlane.f32.xlu0 %v1065
  %v1100 = vpop.xlane.xlu0 %1099
  %1101 = vadd.xlane.f32.xlu0 %v1066
  %v1102 = vpop.xlane.xlu0 %1101
  %1103 = vadd.xlane.f32.xlu0 %v1067
  %v1104 = vpop.xlane.xlu0 %1103
  %1105 = vadd.xlane.f32.xlu0 %v1068
  %v1106 = vpop.xlane.xlu0 %1105
  %1107 = vadd.xlane.f32.xlu0 %v1069
  %v1108 = vpop.xlane.xlu0 %1107
  %1109 = vadd.xlane.f32.xlu0 %v1070
  %v1110 = vpop.xlane.xlu0 %1109
  %1111 = vadd.xlane.f32.xlu0 %v1071
  %v1112 = vpop.xlane.xlu0 %1111
  %1113 = vadd.xlane.f32.xlu0 %v1072
  %v1114 = vpop.xlane.xlu0 %1113
  %1115 = vadd.xlane.f32.xlu0 %v1073
  %v1116 = vpop.xlane.xlu0 %1115
  %1117 = vadd.xlane.f32.xlu0 %v1074
  %v1118 = vpop.xlane.xlu0 %1117
  %1119 = vadd.xlane.f32.xlu0 %v1075
  %v1120 = vpop.xlane.xlu0 %1119
  %1121 = vadd.xlane.f32.xlu0 %v1076
  %v1122 = vpop.xlane.xlu0 %1121
  %1123 = vadd.xlane.f32.xlu0 %v1077
  %v1124 = vpop.xlane.xlu0 %1123
  %1125 = vadd.xlane.f32.xlu0 %v1078
  %v1126 = vpop.xlane.xlu0 %1125
  %1127 = vadd.xlane.f32.xlu0 %v1079
  %v1128 = vpop.xlane.xlu0 %1127
  %1129 = vadd.xlane.f32.xlu0 %v1080
  %v1130 = vpop.xlane.xlu0 %1129
  %1131 = vadd.xlane.f32.xlu0 %v1081
  %v1132 = vpop.xlane.xlu0 %1131
  %1133 = vadd.xlane.f32.xlu0 %v1082
  %v1134 = vpop.xlane.xlu0 %1133
  %1135 = vadd.xlane.f32.xlu0 %v1083
  %v1136 = vpop.xlane.xlu0 %1135
  %1137 = vadd.xlane.f32.xlu0 %v1084
  %v1138 = vpop.xlane.xlu0 %1137
  %1139 = vadd.xlane.f32.xlu0 %v1085
  %v1140 = vpop.xlane.xlu0 %1139
  %1141 = vadd.xlane.f32.xlu0 %v1086
  %v1142 = vpop.xlane.xlu0 %1141
  %1143 = vadd.xlane.f32.xlu0 %v1087
  %v1144 = vpop.xlane.xlu0 %1143
  %1145 = vadd.xlane.f32.xlu0 %v1088
  %v1146 = vpop.xlane.xlu0 %1145
  %1147 = vadd.xlane.f32.xlu0 %v1089
  %v1148 = vpop.xlane.xlu0 %1147
  %1149 = vadd.xlane.f32.xlu0 %v1090
  %v1150 = vpop.xlane.xlu0 %1149
  %1151 = vadd.xlane.f32.xlu0 %v1091
  %v1152 = vpop.xlane.xlu0 %1151
  %1153 = vadd.xlane.f32.xlu0 %v1092
  %v1154 = vpop.xlane.xlu0 %1153
  %1155 = vadd.xlane.f32.xlu0 %v1093
  %v1156 = vpop.xlane.xlu0 %1155
  %1157 = vadd.xlane.f32.xlu0 %v1094
  %v1158 = vpop.xlane.xlu0 %1157
  %v1159 = vrcp.pop %v1096
  %v1160 = vrcp.pop %v1098
  %v1161 = vrcp.pop %v1100
  %v1162 = vrcp.pop %v1102
  %v1163 = vrcp.pop %v1104
  %v1164 = vrcp.pop %v1106
  %v1165 = vrcp.pop %v1108
  %v1166 = vrcp.pop %v1110
  %v1167 = vrcp.pop %v1112
  %v1168 = vrcp.pop %v1114
  %v1169 = vrcp.pop %v1116
  %v1170 = vrcp.pop %v1118
  %v1171 = vrcp.pop %v1120
  %v1172 = vrcp.pop %v1122
  %v1173 = vrcp.pop %v1124
  %v1174 = vrcp.pop %v1126
  %v1175 = vrcp.pop %v1128
  %v1176 = vrcp.pop %v1130
  %v1177 = vrcp.pop %v1132
  %v1178 = vrcp.pop %v1134
  %v1179 = vrcp.pop %v1136
  %v1180 = vrcp.pop %v1138
  %v1181 = vrcp.pop %v1140
  %v1182 = vrcp.pop %v1142
  %v1183 = vrcp.pop %v1144
  %v1184 = vrcp.pop %v1146
  %v1185 = vrcp.pop %v1148
  %v1186 = vrcp.pop %v1150
  %v1187 = vrcp.pop %v1152
  %v1188 = vrcp.pop %v1154
  %v1189 = vrcp.pop %v1156
  %v1190 = vrcp.pop %v1158
  %v1191 = vmul.f32 %v1096, %v1159
  %v1192 = vmul.f32 %v1098, %v1160
  %v1193 = vmul.f32 %v1100, %v1161
  %v1194 = vmul.f32 %v1102, %v1162
  %v1195 = vmul.f32 %v1104, %v1163
  %v1196 = vmul.f32 %v1106, %v1164
  %v1197 = vmul.f32 %v1108, %v1165
  %v1198 = vmul.f32 %v1110, %v1166
  %v1199 = vmul.f32 %v1112, %v1167
  %v1200 = vmul.f32 %v1114, %v1168
  %v1201 = vmul.f32 %v1116, %v1169
  %v1202 = vmul.f32 %v1118, %v1170
  %v1203 = vmul.f32 %v1120, %v1171
  %v1204 = vmul.f32 %v1122, %v1172
  %v1205 = vmul.f32 %v1124, %v1173
  %v1206 = vmul.f32 %v1126, %v1174
  %v1207 = vmul.f32 %v1128, %v1175
  %v1208 = vmul.f32 %v1130, %v1176
  %v1209 = vmul.f32 %v1132, %v1177
  %v1210 = vmul.f32 %v1134, %v1178
  %v1211 = vmul.f32 %v1136, %v1179
  %v1212 = vmul.f32 %v1138, %v1180
  %v1213 = vmul.f32 %v1140, %v1181
  %v1214 = vmul.f32 %v1142, %v1182
  %v1215 = vmul.f32 %v1144, %v1183
  %v1216 = vmul.f32 %v1146, %v1184
  %v1217 = vmul.f32 %v1148, %v1185
  %v1218 = vmul.f32 %v1150, %v1186
  %v1219 = vmul.f32 %v1152, %v1187
  %v1220 = vmul.f32 %v1154, %v1188
  %v1221 = vmul.f32 %v1156, %v1189
  %v1222 = vmul.f32 %v1158, %v1190
  %v1223 = vsub.f32 2.0, %v1191
  %v1224 = vsub.f32 2.0, %v1192
  %v1225 = vsub.f32 2.0, %v1193
  %v1226 = vsub.f32 2.0, %v1194
  %v1227 = vsub.f32 2.0, %v1195
  %v1228 = vsub.f32 2.0, %v1196
  %v1229 = vsub.f32 2.0, %v1197
  %v1230 = vsub.f32 2.0, %v1198
  %v1231 = vsub.f32 2.0, %v1199
  %v1232 = vsub.f32 2.0, %v1200
  %v1233 = vsub.f32 2.0, %v1201
  %v1234 = vsub.f32 2.0, %v1202
  %v1235 = vsub.f32 2.0, %v1203
  %v1236 = vsub.f32 2.0, %v1204
  %v1237 = vsub.f32 2.0, %v1205
  %v1238 = vsub.f32 2.0, %v1206
  %v1239 = vsub.f32 2.0, %v1207
  %v1240 = vsub.f32 2.0, %v1208
  %v1241 = vsub.f32 2.0, %v1209
  %v1242 = vsub.f32 2.0, %v1210
  %v1243 = vsub.f32 2.0, %v1211
  %v1244 = vsub.f32 2.0, %v1212
  %v1245 = vsub.f32 2.0, %v1213
  %v1246 = vsub.f32 2.0, %v1214
  %v1247 = vsub.f32 2.0, %v1215
  %v1248 = vsub.f32 2.0, %v1216
  %v1249 = vsub.f32 2.0, %v1217
  %v1250 = vsub.f32 2.0, %v1218
  %v1251 = vsub.f32 2.0, %v1219
  %v1252 = vsub.f32 2.0, %v1220
  %v1253 = vsub.f32 2.0, %v1221
  %v1254 = vsub.f32 2.0, %v1222
  %v1255 = vmul.f32 %v1159, %v1223
  %v1256 = vmul.f32 %v1160, %v1224
  %v1257 = vmul.f32 %v1161, %v1225
  %v1258 = vmul.f32 %v1162, %v1226
  %v1259 = vmul.f32 %v1163, %v1227
  %v1260 = vmul.f32 %v1164, %v1228
  %v1261 = vmul.f32 %v1165, %v1229
  %v1262 = vmul.f32 %v1166, %v1230
  %v1263 = vmul.f32 %v1167, %v1231
  %v1264 = vmul.f32 %v1168, %v1232
  %v1265 = vmul.f32 %v1169, %v1233
  %v1266 = vmul.f32 %v1170, %v1234
  %v1267 = vmul.f32 %v1171, %v1235
  %v1268 = vmul.f32 %v1172, %v1236
  %v1269 = vmul.f32 %v1173, %v1237
  %v1270 = vmul.f32 %v1174, %v1238
  %v1271 = vmul.f32 %v1175, %v1239
  %v1272 = vmul.f32 %v1176, %v1240
  %v1273 = vmul.f32 %v1177, %v1241
  %v1274 = vmul.f32 %v1178, %v1242
  %v1275 = vmul.f32 %v1179, %v1243
  %v1276 = vmul.f32 %v1180, %v1244
  %v1277 = vmul.f32 %v1181, %v1245
  %v1278 = vmul.f32 %v1182, %v1246
  %v1279 = vmul.f32 %v1183, %v1247
  %v1280 = vmul.f32 %v1184, %v1248
  %v1281 = vmul.f32 %v1185, %v1249
  %v1282 = vmul.f32 %v1186, %v1250
  %v1283 = vmul.f32 %v1187, %v1251
  %v1284 = vmul.f32 %v1188, %v1252
  %v1285 = vmul.f32 %v1189, %v1253
  %v1286 = vmul.f32 %v1190, %v1254
  %v1287 = vmul.f32 %v1063, %v1255
  %v1288 = vmul.f32 %v1064, %v1256
  %v1289 = vmul.f32 %v1065, %v1257
  %v1290 = vmul.f32 %v1066, %v1258
  %v1291 = vmul.f32 %v1067, %v1259
  %v1292 = vmul.f32 %v1068, %v1260
  %v1293 = vmul.f32 %v1069, %v1261
  %v1294 = vmul.f32 %v1070, %v1262
  %v1295 = vmul.f32 %v1071, %v1263
  %v1296 = vmul.f32 %v1072, %v1264
  %v1297 = vmul.f32 %v1073, %v1265
  %v1298 = vmul.f32 %v1074, %v1266
  %v1299 = vmul.f32 %v1075, %v1267
  %v1300 = vmul.f32 %v1076, %v1268
  %v1301 = vmul.f32 %v1077, %v1269
  %v1302 = vmul.f32 %v1078, %v1270
  %v1303 = vmul.f32 %v1079, %v1271
  %v1304 = vmul.f32 %v1080, %v1272
  %v1305 = vmul.f32 %v1081, %v1273
  %v1306 = vmul.f32 %v1082, %v1274
  %v1307 = vmul.f32 %v1083, %v1275
  %v1308 = vmul.f32 %v1084, %v1276
  %v1309 = vmul.f32 %v1085, %v1277
  %v1310 = vmul.f32 %v1086, %v1278
  %v1311 = vmul.f32 %v1087, %v1279
  %v1312 = vmul.f32 %v1088, %v1280
  %v1313 = vmul.f32 %v1089, %v1281
  %v1314 = vmul.f32 %v1090, %v1282
  %v1315 = vmul.f32 %v1091, %v1283
  %v1316 = vmul.f32 %v1092, %v1284
  %v1317 = vmul.f32 %v1093, %v1285
  %v1318 = vmul.f32 %v1094, %v1286
  %v1319 = vpack.c.bf16 %v1288, %v1287
  %v1320 = vpack.c.bf16 %v1290, %v1289
  %v1321 = vpack.c.bf16 %v1292, %v1291
  %v1322 = vpack.c.bf16 %v1294, %v1293
  %v1323 = vpack.c.bf16 %v1296, %v1295
  %v1324 = vpack.c.bf16 %v1298, %v1297
  %v1325 = vpack.c.bf16 %v1300, %v1299
  %v1326 = vpack.c.bf16 %v1302, %v1301
  %v1327 = vpack.c.bf16 %v1304, %v1303
  %v1328 = vpack.c.bf16 %v1306, %v1305
  %v1329 = vpack.c.bf16 %v1308, %v1307
  %v1330 = vpack.c.bf16 %v1310, %v1309
  %v1331 = vpack.c.bf16 %v1312, %v1311
  %v1332 = vpack.c.bf16 %v1314, %v1313
  %v1333 = vpack.c.bf16 %v1316, %v1315
  %v1334 = vpack.c.bf16 %v1318, %v1317
  %v1351 = vunpack.c.l.b16 %v1319
  %v1352 = vunpack.c.h.b16 %v1319
  %v1353 = vunpack.c.l.b16 %v1320
  %v1354 = vunpack.c.h.b16 %v1320
  %v1355 = vunpack.c.l.b16 %v1321
  %v1356 = vunpack.c.h.b16 %v1321
  %v1357 = vunpack.c.l.b16 %v1322
  %v1358 = vunpack.c.h.b16 %v1322
  %v1359 = vunpack.c.l.b16 %v1323
  %v1360 = vunpack.c.h.b16 %v1323
  %v1361 = vunpack.c.l.b16 %v1324
  %v1362 = vunpack.c.h.b16 %v1324
  %v1363 = vunpack.c.l.b16 %v1325
  %v1364 = vunpack.c.h.b16 %v1325
  %v1365 = vunpack.c.l.b16 %v1326
  %v1366 = vunpack.c.h.b16 %v1326
  %v1367 = vunpack.c.l.b16 %v1327
  %v1368 = vunpack.c.h.b16 %v1327
  %v1369 = vunpack.c.l.b16 %v1328
  %v1370 = vunpack.c.h.b16 %v1328
  %v1371 = vunpack.c.l.b16 %v1329
  %v1372 = vunpack.c.h.b16 %v1329
  %v1373 = vunpack.c.l.b16 %v1330
  %v1374 = vunpack.c.h.b16 %v1330
  %v1375 = vunpack.c.l.b16 %v1331
  %v1376 = vunpack.c.h.b16 %v1331
  %v1377 = vunpack.c.l.b16 %v1332
  %v1378 = vunpack.c.h.b16 %v1332
  %v1379 = vunpack.c.l.b16 %v1333
  %v1380 = vunpack.c.h.b16 %v1333
  %v1381 = vunpack.c.l.b16 %v1334
  %v1382 = vunpack.c.h.b16 %v1334
  %v1383 = vpack.c.b16 %v1351, %v1351
  %v1384 = vpack.c.b16 %v1352, %v1352
  %v1385 = vpack.c.b16 %v1353, %v1353
  %v1386 = vpack.c.b16 %v1354, %v1354
  %v1387 = vpack.c.b16 %v1355, %v1355
  %v1388 = vpack.c.b16 %v1356, %v1356
  %v1389 = vpack.c.b16 %v1357, %v1357
  %v1390 = vpack.c.b16 %v1358, %v1358
  %v1391 = vpack.c.b16 %v1359, %v1359
  %v1392 = vpack.c.b16 %v1360, %v1360
  %v1393 = vpack.c.b16 %v1361, %v1361
  %v1394 = vpack.c.b16 %v1362, %v1362
  %v1395 = vpack.c.b16 %v1363, %v1363
  %v1396 = vpack.c.b16 %v1364, %v1364
  %v1397 = vpack.c.b16 %v1365, %v1365
  %v1398 = vpack.c.b16 %v1366, %v1366
  %v1399 = vpack.c.b16 %v1367, %v1367
  %v1400 = vpack.c.b16 %v1368, %v1368
  %v1401 = vpack.c.b16 %v1369, %v1369
  %v1402 = vpack.c.b16 %v1370, %v1370
  %v1403 = vpack.c.b16 %v1371, %v1371
  %v1404 = vpack.c.b16 %v1372, %v1372
  %v1405 = vpack.c.b16 %v1373, %v1373
  %v1406 = vpack.c.b16 %v1374, %v1374
  %v1407 = vpack.c.b16 %v1375, %v1375
  %v1408 = vpack.c.b16 %v1376, %v1376
  %v1409 = vpack.c.b16 %v1377, %v1377
  %v1410 = vpack.c.b16 %v1378, %v1378
  %v1411 = vpack.c.b16 %v1379, %v1379
  %v1412 = vpack.c.b16 %v1380, %v1380
  %v1413 = vpack.c.b16 %v1381, %v1381
  %v1414 = vpack.c.b16 %v1382, %v1382
  %1447 = vst [vmem:[%s7] sm:$0xf] %v1383
  %1448 = vst [vmem:[%s7 + $0x4] sm:$0xf] %v1384
  %1449 = vst [vmem:[%s7 + $0x8] sm:$0xf] %v1385
  %1450 = vst [vmem:[%s7 + $0xc] sm:$0xf] %v1386
  %1451 = vst [vmem:[%s7 + $0x10] sm:$0xf] %v1387
  %1452 = vst [vmem:[%s7 + $0x14] sm:$0xf] %v1388
  %1453 = vst [vmem:[%s7 + $0x18] sm:$0xf] %v1389
  %1454 = vst [vmem:[%s7 + $0x1c] sm:$0xf] %v1390
  %1455 = vst [vmem:[%s7 + $0x20] sm:$0xf] %v1391
  %1456 = vst [vmem:[%s7 + $0x24] sm:$0xf] %v1392
  %1457 = vst [vmem:[%s7 + $0x28] sm:$0xf] %v1393
  %1458 = vst [vmem:[%s7 + $0x2c] sm:$0xf] %v1394
  %1459 = vst [vmem:[%s7 + $0x30] sm:$0xf] %v1395
  %1460 = vst [vmem:[%s7 + $0x34] sm:$0xf] %v1396
  %1461 = vst [vmem:[%s7 + $0x38] sm:$0xf] %v1397
  %1462 = vst [vmem:[%s7 + $0x3c] sm:$0xf] %v1398
  %1463 = vst [vmem:[%s7 + $0x40] sm:$0xf] %v1399
  %1464 = vst [vmem:[%s7 + $0x44] sm:$0xf] %v1400
  %1465 = vst [vmem:[%s7 + $0x48] sm:$0xf] %v1401
  %1466 = vst [vmem:[%s7 + $0x4c] sm:$0xf] %v1402
  %1467 = vst [vmem:[%s7 + $0x50] sm:$0xf] %v1403
  %1468 = vst [vmem:[%s7 + $0x54] sm:$0xf] %v1404
  %1469 = vst [vmem:[%s7 + $0x58] sm:$0xf] %v1405
  %1470 = vst [vmem:[%s7 + $0x5c] sm:$0xf] %v1406
  %1471 = vst [vmem:[%s7 + $0x60] sm:$0xf] %v1407
  %1472 = vst [vmem:[%s7 + $0x64] sm:$0xf] %v1408
  %1473 = vst [vmem:[%s7 + $0x68] sm:$0xf] %v1409
  %1474 = vst [vmem:[%s7 + $0x6c] sm:$0xf] %v1410
  %1475 = vst [vmem:[%s7 + $0x70] sm:$0xf] %v1411
  %1476 = vst [vmem:[%s7 + $0x74] sm:$0xf] %v1412
  %1477 = vst [vmem:[%s7 + $0x78] sm:$0xf] %v1413
  %1478 = vst [vmem:[%s7 + $0x7c] sm:$0xf] %v1414
  // Predicated region
  $region30: #{dnn_forward.1} parent=0 // pred_check
    _
  $region31: #{dnn_forward.1} parent=0 // pred_check_branch
    %1480 = sbr.rel (0) target = $region33
  $region32: #{dnn_forward.1} parent=0 // pred_region
    _
  $region33: #{dnn_forward.1} parent=0 // pred_fallthru
    _
  // Predicated region
  $region34: #{dnn_forward.1} parent=0 // pred_check
    _
  $region35: #{dnn_forward.1} parent=0 // pred_check_branch
    %1482 = sbr.rel (0) target = $region37
  $region36: #{dnn_forward.1} parent=0 // pred_region
    _
  $region37: #{dnn_forward.1} parent=0 // pred_fallthru
    _

</llo_original>
